<compile_context>
chip_gen: v7x
topology: tpu7x:2x2x1
jax: 0.10.0
libtpu: 0.0.40
codegen_flags: <defaults>
</compile_context>

<pallas_src>
import functools

import numpy as np

import jax
import jax.numpy as jnp
from jax import lax
from jax.experimental import pallas as pl
from jax.experimental.pallas import tpu as pltpu


# --------------------------------------------------------------------------- #
# Fused Attention1 kernel (one grid step == one group of `btile` batch elems,
# packed along the lane axis: N = btile * H * W).
# --------------------------------------------------------------------------- #
def _attention1_kernel(x_ref, m_ref, w_kv_ref, w_q_ref, b_pw_ref, w_dw_ref,
                       b_dw_ref, dwmask_ref, temp_ref, hmask_ref,
                       w_proj_ref, b_proj_ref, o_ref, *, H, W, btile):
    f32 = jnp.float32
    bf16 = jnp.bfloat16
    _, C, N = o_ref.shape
    HW = H * W
    C2 = 2 * C

    x = x_ref[0]                                 # (C, N) bf16
    m = m_ref[0]                                 # (C, N) bf16
    b_pw = b_pw_ref[...]                         # (3C, 1) f32, row order [k,v | q]
    dw_w = w_dw_ref[...]                         # (3C, 9) f32 per-channel 3x3 taps
    dw_b = b_dw_ref[...]                         # (3C, 1) f32

    # ---- 1x1 qkv conv: only the used columns (k,v from x; q from message) ----
    kv = jnp.dot(w_kv_ref[...], x, preferred_element_type=f32) + b_pw[:C2]   # (2C, N)
    qm = jnp.dot(w_q_ref[...], m, preferred_element_type=f32) + b_pw[C2:]    # (C, N)

    # ---- 3x3 depthwise conv, padding=1: lane rolls + boundary masks ----------
    # Tap offsets in flattened row-major (H, W).  Batch elements are packed
    # contiguously along lanes; any roll that would read across a batch (or
    # image) boundary is exactly an out-of-bounds tap and is masked to zero.
    offs = [(di - 1) * W + (dj - 1) for di in range(3) for dj in range(3)]

    def dwconv(inp, taps, bias):
        acc = bias + taps[:, 4:5] * inp          # center tap == identity shift
        for t in range(9):
            if t == 4:
                continue
            shifted = pltpu.roll(inp, shift=(-offs[t]) % N, axis=1)
            acc = acc + taps[:, t:t + 1] * (shifted * dwmask_ref[t])
        return acc

    kv = dwconv(kv, dw_w[:C2], dw_b[:C2])
    qm = dwconv(qm, dw_w[C2:], dw_b[C2:])
    k_all, v_all = kv[:C], kv[C:]

    temp = temp_ref[...]                         # (C, 1) per-row temperature
    hmask = hmask_ref[...]                       # (C, C) additive head mask
    eps2 = f32(1e-24)

    outs = []
    for b in range(btile):                       # per packed batch element
        lo = b * HW
        kb = k_all[:, lo:lo + HW]
        vb = v_all[:, lo:lo + HW]
        qb = qm[:, lo:lo + HW]
        # torch F.normalize(dim=-1), eps=1e-12 (rsqrt on the EUP), all in f32.
        kb = kb * lax.rsqrt(jnp.maximum(jnp.sum(kb * kb, axis=-1, keepdims=True), eps2))
        qb = qb * lax.rsqrt(jnp.maximum(jnp.sum(qb * qb, axis=-1, keepdims=True), eps2))
        qb = qb * temp                           # fold per-head temperature into q rows
        # All heads in one (C, C) gram; off-head blocks masked additively.
        # Exactly equals the per-head softmax (right call only while C is small).
        logits = lax.dot_general(qb.astype(bf16), kb.astype(bf16),
                                 (((1,), (1,)), ((), ())),
                                 preferred_element_type=f32) + hmask
        logits = logits - jnp.max(logits, axis=-1, keepdims=True)
        e = jnp.exp(logits)
        attn = e * pl.reciprocal(jnp.sum(e, axis=-1, keepdims=True), approx=True)
        outs.append(jnp.dot(attn.astype(bf16), vb.astype(bf16),
                            preferred_element_type=f32))                    # (C, HW)

    out = outs[0] if btile == 1 else jnp.concatenate(outs, axis=1)           # (C, N)

    # ---- project_out 1x1 conv; lane-dense (N >= 128) unmasked store ----------
    y = jnp.dot(w_proj_ref[...], out.astype(bf16),
                preferred_element_type=f32) + b_proj_ref[...]
    o_ref[0] = y.astype(o_ref.dtype)


# --------------------------------------------------------------------------- #
# Host-side constants
# --------------------------------------------------------------------------- #
def _dw_boundary_masks(H, W, btile):
    """(9, 1, btile*H*W) mask: 1 where tap t reads an in-bounds pixel."""
    HW = H * W
    m = np.zeros((9, HW), np.float32)
    for di in range(3):
        for dj in range(3):
            t = di * 3 + dj
            for i in range(H):
                if not (0 <= i + di - 1 < H):
                    continue
                for j in range(W):
                    if 0 <= j + dj - 1 < W:
                        m[t, i * W + j] = 1.0
    return jnp.asarray(np.tile(m, (1, btile))[:, None, :])


def _head_mask(C, num_heads):
    """(C, C) additive mask: 0 on same-head blocks, -1e30 elsewhere."""
    h = np.arange(C) // (C // num_heads)
    return jnp.asarray(np.where(h[:, None] == h[None, :], 0.0, -1e30).astype(np.float32))


def _pick_btile(B, HW, lane_target=128, lane_cap=1024):
    """Largest power-of-two divisor of B such that btile*HW reaches ~128 lanes."""
    bt = 1
    while B % (bt * 2) == 0 and bt * HW < lane_target and bt * 2 * HW <= lane_cap:
        bt *= 2
    return bt


# --------------------------------------------------------------------------- #
# Wrapper: NCHW in / NCHW out, everything hot inside one pallas_call.
# --------------------------------------------------------------------------- #
def attention1_forward(x_nchw, msg_nchw, params, num_heads):
    B, C, H, W = x_nchw.shape
    HW = H * W
    C2, C3 = 2 * C, 3 * C
    dt = x_nchw.dtype
    f32, bf16 = jnp.float32, jnp.bfloat16

    btile = _pick_btile(B, HW)
    bg = B // btile
    N = btile * HW

    # --- tiny parameter preprocessing (traced once under jit) ---------------
    w_qkv = params["w_qkv"].astype(f32)                       # (3C, C): rows q|k|v
    b_qkv = params["b_qkv"].astype(f32)
    w_dw9 = params["w_dw"].astype(f32).reshape(C3, 9)         # per-channel 3x3 taps
    b_dw9 = params["b_dw"].astype(f32)

    # Stacked row order used in the kernel: [k, v | q] (dead q/k_m/v_m dropped).
    w_kv = w_qkv[C:].astype(bf16)                             # (2C, C)
    w_q = w_qkv[:C].astype(bf16)                              # (C, C)
    b_pw = jnp.concatenate([b_qkv[C:], b_qkv[:C]])[:, None]   # (3C, 1)
    w_dw = jnp.concatenate([w_dw9[C:], w_dw9[:C]], axis=0)    # (3C, 9)
    b_dw = jnp.concatenate([b_dw9[C:], b_dw9[:C]])[:, None]   # (3C, 1)
    temp = jnp.repeat(params["temperature"].reshape(num_heads).astype(f32),
                      C // num_heads)[:, None]                # (C, 1)
    w_proj = params["w_proj"].astype(bf16)                    # (C, C)
    b_proj = params["b_proj"].astype(f32)[:, None]            # (C, 1)
    dw_mask = _dw_boundary_masks(H, W, btile)                 # (9, 1, N)
    h_mask = _head_mask(C, num_heads)                         # (C, C)

    # Lane-pack btile batch elements next to HW (layout plumbing so the kernel
    # sees lane-dense (C, N>=128) tiles and does unmasked stores).
    def pack(a):
        a = a.reshape(bg, btile, C, HW)
        return jnp.transpose(a, (0, 2, 1, 3)).reshape(bg, C, N).astype(bf16)

    x_p, m_p = pack(x_nchw), pack(msg_nchw)

    kernel = functools.partial(_attention1_kernel, H=H, W=W, btile=btile)

    def const(shape):
        return pl.BlockSpec(shape, lambda g: (0,) * len(shape))

    out = pl.pallas_call(
        kernel,
        out_shape=jax.ShapeDtypeStruct((bg, C, N), dt),
        grid=(bg,),
        in_specs=[
            pl.BlockSpec((1, C, N), lambda g: (g, 0, 0)),     # x (packed)
            pl.BlockSpec((1, C, N), lambda g: (g, 0, 0)),     # message (packed)
            const((C2, C)),        # w_kv
            const((C, C)),         # w_q
            const((C3, 1)),        # b_pw (stacked k,v | q)
            const((C3, 9)),        # w_dw (stacked)
            const((C3, 1)),        # b_dw (stacked)
            const((9, 1, N)),      # dwconv boundary masks
            const((C, 1)),         # per-row temperature
            const((C, C)),         # additive head mask
            const((C, C)),         # w_proj
            const((C, 1)),         # b_proj
        ],
        out_specs=pl.BlockSpec((1, C, N), lambda g: (g, 0, 0)),
        compiler_params=pltpu.CompilerParams(
            dimension_semantics=("parallel",),
        ),
    )(x_p, m_p, w_kv, w_q, b_pw, w_dw, b_dw, dw_mask, temp, h_mask,
      w_proj, b_proj)

    out = out.reshape(bg, C, btile, HW)
    return jnp.transpose(out, (0, 2, 1, 3)).reshape(B, C, H, W)


# --------------------------------------------------------------------------- #
# Pure-JAX reference (matches the PyTorch Attention1.forward semantics)
# --------------------------------------------------------------------------- #
def ref_forward(x, message, params, num_heads):
    B, C, H, W = x.shape
    dn = ("NCHW", "HWIO", "NCHW")
    prec = lax.Precision.HIGHEST
    w_qkv = jnp.transpose(params["w_qkv"])[None, None]                 # (1,1,C,3C)
    w_dw = jnp.transpose(params["w_dw"], (1, 2, 0))[:, :, None, :]     # (3,3,1,3C)
    w_proj = jnp.transpose(params["w_proj"])[None, None]               # (1,1,C,C)

    def qkv_branch(inp):
        y = lax.conv_general_dilated(inp, w_qkv, (1, 1), "VALID",
                                     dimension_numbers=dn, precision=prec)
        y = y + params["b_qkv"][None, :, None, None]
        y = lax.conv_general_dilated(y, w_dw, (1, 1), ((1, 1), (1, 1)),
                                     feature_group_count=3 * C,
                                     dimension_numbers=dn, precision=prec)
        return y + params["b_dw"][None, :, None, None]

    qkv = qkv_branch(x)
    qkv_m = qkv_branch(message)
    _, k, v = jnp.split(qkv, 3, axis=1)
    q_m, _, _ = jnp.split(qkv_m, 3, axis=1)

    def heads(t):
        return t.reshape(B, num_heads, C // num_heads, H * W)

    k, v, q_m = heads(k), heads(v), heads(q_m)
    k = k / jnp.maximum(jnp.linalg.norm(k, axis=-1, keepdims=True), 1e-12)
    q_m = q_m / jnp.maximum(jnp.linalg.norm(q_m, axis=-1, keepdims=True), 1e-12)
    attn = jnp.einsum("bhcx,bhdx->bhcd", q_m, k, precision=prec)
    attn = attn * params["temperature"][None]
    attn = jax.nn.softmax(attn, axis=-1)
    out = jnp.einsum("bhcd,bhdx->bhcx", attn, v, precision=prec).reshape(B, C, H, W)
    out = lax.conv_general_dilated(out, w_proj, (1, 1), "VALID",
                                   dimension_numbers=dn, precision=prec)
    return out + params["b_proj"][None, :, None, None]


if __name__ == "__main__":
    B, C, H, W = 2, 16, 8, 8       # dim=16, spatial 8x8
    num_heads = 4                  # head dim = 4
    key = jax.random.PRNGKey(0)
    ks = jax.random.split(key, 9)
    x = jax.random.normal(ks[0], (B, C, H, W), jnp.float32)
    message = jax.random.normal(ks[1], (B, C, H, W), jnp.float32)

    # Deterministic synthetic parameters (bias=True variant of the module),
    # stored in PyTorch-native (out, in) / (out, kh, kw) shapes.
    params = {
        "w_qkv": 0.1 * jax.random.normal(ks[2], (3 * C, C), jnp.float32),
        "b_qkv": 0.1 * jax.random.normal(ks[3], (3 * C,), jnp.float32),
        "w_dw": 0.1 * jax.random.normal(ks[4], (3 * C, 3, 3), jnp.float32),
        "b_dw": 0.1 * jax.random.normal(ks[5], (3 * C,), jnp.float32),
        "w_proj": 0.1 * jax.random.normal(ks[6], (C, C), jnp.float32),
        "b_proj": 0.1 * jax.random.normal(ks[7], (C,), jnp.float32),
        # non-trivial per-head temperature to exercise that path
        "temperature": 1.0 + 0.1 * jax.random.normal(ks[8], (num_heads, 1, 1), jnp.float32),
    }

    fwd = jax.jit(functools.partial(attention1_forward, num_heads=num_heads))
    out = jax.block_until_ready(fwd(x, message, params))

    ref = ref_forward(x, message, params, num_heads)
    assert out.shape == (B, C, H, W)
    err = float(jnp.max(jnp.abs(out - ref)))
    # Tolerance accounts for bf16 MXU operands (f32 accumulation) and the
    # approximate (EUP) softmax reciprocal vs. the f32-HIGHEST reference.
    assert jnp.allclose(out, ref, atol=5e-3, rtol=5e-3), err
    print("KERNEL_OK")
</pallas_src>

<mosaic_0001>
module attributes {stable_mosaic.version = 11 : i64} {
  func.func @_attention1_kernel(%arg0: i32, %arg1: memref<1x16x128xbf16, #tpu.memory_space<vmem>>, %arg2: memref<1x16x128xbf16, #tpu.memory_space<vmem>>, %arg3: memref<32x16xbf16, #tpu.memory_space<vmem>>, %arg4: memref<16x16xbf16, #tpu.memory_space<vmem>>, %arg5: memref<48x1xf32, #tpu.memory_space<vmem>>, %arg6: memref<48x9xf32, #tpu.memory_space<vmem>>, %arg7: memref<48x1xf32, #tpu.memory_space<vmem>>, %arg8: memref<9x1x128xf32, #tpu.memory_space<vmem>>, %arg9: memref<16x1xf32, #tpu.memory_space<vmem>>, %arg10: memref<16x16xf32, #tpu.memory_space<vmem>>, %arg11: memref<16x16xbf16, #tpu.memory_space<vmem>>, %arg12: memref<16x1xf32, #tpu.memory_space<vmem>>, %arg13: memref<1x16x128xf32, #tpu.memory_space<vmem>>) attributes {dimension_semantics = [#tpu.dimension_semantics<parallel>], iteration_bounds = array<i64: 1>, scalar_prefetch = 0 : i64, scratch_operands = 0 : i64, tpu.core_type = #tpu.core_type<tc>, window_params = [{transform_indices = @transform_0, window_bounds = array<i64: 1, 16, 128>}, {transform_indices = @transform_1, window_bounds = array<i64: 1, 16, 128>}, {pipeline_mode = #tpu.pipeline_mode<synchronous>, transform_indices = @transform_2, window_bounds = array<i64: 32, 16>}, {pipeline_mode = #tpu.pipeline_mode<synchronous>, transform_indices = @transform_3, window_bounds = array<i64: 16, 16>}, {pipeline_mode = #tpu.pipeline_mode<synchronous>, transform_indices = @transform_4, window_bounds = array<i64: 48, 1>}, {pipeline_mode = #tpu.pipeline_mode<synchronous>, transform_indices = @transform_5, window_bounds = array<i64: 48, 9>}, {pipeline_mode = #tpu.pipeline_mode<synchronous>, transform_indices = @transform_6, window_bounds = array<i64: 48, 1>}, {pipeline_mode = #tpu.pipeline_mode<synchronous>, transform_indices = @transform_7, window_bounds = array<i64: 9, 1, 128>}, {pipeline_mode = #tpu.pipeline_mode<synchronous>, transform_indices = @transform_8, window_bounds = array<i64: 16, 1>}, {pipeline_mode = #tpu.pipeline_mode<synchronous>, transform_indices = @transform_9, window_bounds = array<i64: 16, 16>}, {pipeline_mode = #tpu.pipeline_mode<synchronous>, transform_indices = @transform_10, window_bounds = array<i64: 16, 16>}, {pipeline_mode = #tpu.pipeline_mode<synchronous>, transform_indices = @transform_11, window_bounds = array<i64: 16, 1>}, {transform_indices = @transform_12, window_bounds = array<i64: 1, 16, 128>}]} {
    %c0 = arith.constant 0 : index
    %c0_0 = arith.constant 0 : index
    %c0_1 = arith.constant 0 : index
    %0 = vector.load %arg1[%c0, %c0_0, %c0_1] : memref<1x16x128xbf16, #tpu.memory_space<vmem>>, vector<1x16x128xbf16>
    %1 = vector.shape_cast %0 : vector<1x16x128xbf16> to vector<16x128xbf16>
    %c0_2 = arith.constant 0 : index
    %c0_3 = arith.constant 0 : index
    %c0_4 = arith.constant 0 : index
    %2 = vector.load %arg2[%c0_2, %c0_3, %c0_4] : memref<1x16x128xbf16, #tpu.memory_space<vmem>>, vector<1x16x128xbf16>
    %3 = vector.shape_cast %2 : vector<1x16x128xbf16> to vector<16x128xbf16>
    %c0_5 = arith.constant 0 : index
    %c0_6 = arith.constant 0 : index
    %4 = vector.load %arg5[%c0_5, %c0_6] : memref<48x1xf32, #tpu.memory_space<vmem>>, vector<48x1xf32>
    %c0_7 = arith.constant 0 : index
    %c0_8 = arith.constant 0 : index
    %5 = vector.load %arg6[%c0_7, %c0_8] : memref<48x9xf32, #tpu.memory_space<vmem>>, vector<48x9xf32>
    %c0_9 = arith.constant 0 : index
    %c0_10 = arith.constant 0 : index
    %6 = vector.load %arg7[%c0_9, %c0_10] : memref<48x1xf32, #tpu.memory_space<vmem>>, vector<48x1xf32>
    %c0_11 = arith.constant 0 : index
    %c0_12 = arith.constant 0 : index
    %7 = vector.load %arg3[%c0_11, %c0_12] : memref<32x16xbf16, #tpu.memory_space<vmem>>, vector<32x16xbf16>
    %cst = arith.constant dense<0.000000e+00> : vector<32x128xf32>
    %8 = tpu.matmul %7, %1, %cst {dimension_numbers = #tpu.dot_dimension_numbers<[1], [0], [0], [1], [0, 0, 1, 1], [], []>} : vector<32x16xbf16>, vector<16x128xbf16>, vector<32x128xf32> -> vector<32x128xf32>
    %9 = vector.extract_strided_slice %4 {offsets = [0, 0], sizes = [32, 1], strides = [1, 1]} : vector<48x1xf32> to vector<32x1xf32>
    %10 = vector.broadcast %9 : vector<32x1xf32> to vector<32x128xf32>
    %11 = arith.addf %8, %10 : vector<32x128xf32>
    %c0_13 = arith.constant 0 : index
    %c0_14 = arith.constant 0 : index
    %12 = vector.load %arg4[%c0_13, %c0_14] : memref<16x16xbf16, #tpu.memory_space<vmem>>, vector<16x16xbf16>
    %cst_15 = arith.constant dense<0.000000e+00> : vector<16x128xf32>
    %13 = tpu.matmul %12, %3, %cst_15 {dimension_numbers = #tpu.dot_dimension_numbers<[1], [0], [0], [1], [0, 0, 1, 1], [], []>} : vector<16x16xbf16>, vector<16x128xbf16>, vector<16x128xf32> -> vector<16x128xf32>
    %14 = vector.extract_strided_slice %4 {offsets = [32, 0], sizes = [16, 1], strides = [1, 1]} : vector<48x1xf32> to vector<16x1xf32>
    %15 = vector.broadcast %14 : vector<16x1xf32> to vector<16x128xf32>
    %16 = arith.addf %13, %15 : vector<16x128xf32>
    %17 = vector.extract_strided_slice %5 {offsets = [0, 0], sizes = [32, 9], strides = [1, 1]} : vector<48x9xf32> to vector<32x9xf32>
    %18 = vector.extract_strided_slice %6 {offsets = [0, 0], sizes = [32, 1], strides = [1, 1]} : vector<48x1xf32> to vector<32x1xf32>
    %19 = vector.extract_strided_slice %17 {offsets = [0, 4], sizes = [32, 1], strides = [1, 1]} : vector<32x9xf32> to vector<32x1xf32>
    %20 = vector.broadcast %19 : vector<32x1xf32> to vector<32x128xf32>
    %21 = arith.mulf %20, %11 : vector<32x128xf32>
    %22 = vector.broadcast %18 : vector<32x1xf32> to vector<32x128xf32>
    %23 = arith.addf %22, %21 : vector<32x128xf32>
    %c9_i32 = arith.constant 9 : i32
    %24 = tpu.dynamic_rotate %11 by %c9_i32 dim 1 : vector<32x128xf32>, i32 -> vector<32x128xf32>
    %25 = vector.extract_strided_slice %17 {offsets = [0, 0], sizes = [32, 1], strides = [1, 1]} : vector<32x9xf32> to vector<32x1xf32>
    %c0_16 = arith.constant 0 : index
    %c0_17 = arith.constant 0 : index
    %c0_18 = arith.constant 0 : index
    %26 = vector.load %arg8[%c0_16, %c0_17, %c0_18] : memref<9x1x128xf32, #tpu.memory_space<vmem>>, vector<1x1x128xf32>
    %27 = vector.shape_cast %26 : vector<1x1x128xf32> to vector<1x128xf32>
    %28 = vector.broadcast %27 : vector<1x128xf32> to vector<32x128xf32>
    %29 = arith.mulf %24, %28 : vector<32x128xf32>
    %30 = vector.broadcast %25 : vector<32x1xf32> to vector<32x128xf32>
    %31 = arith.mulf %30, %29 : vector<32x128xf32>
    %32 = arith.addf %23, %31 : vector<32x128xf32>
    %c8_i32 = arith.constant 8 : i32
    %33 = tpu.dynamic_rotate %11 by %c8_i32 dim 1 : vector<32x128xf32>, i32 -> vector<32x128xf32>
    %34 = vector.extract_strided_slice %17 {offsets = [0, 1], sizes = [32, 1], strides = [1, 1]} : vector<32x9xf32> to vector<32x1xf32>
    %c1 = arith.constant 1 : index
    %c0_19 = arith.constant 0 : index
    %c0_20 = arith.constant 0 : index
    %35 = vector.load %arg8[%c1, %c0_19, %c0_20] : memref<9x1x128xf32, #tpu.memory_space<vmem>>, vector<1x1x128xf32>
    %36 = vector.shape_cast %35 : vector<1x1x128xf32> to vector<1x128xf32>
    %37 = vector.broadcast %36 : vector<1x128xf32> to vector<32x128xf32>
    %38 = arith.mulf %33, %37 : vector<32x128xf32>
    %39 = vector.broadcast %34 : vector<32x1xf32> to vector<32x128xf32>
    %40 = arith.mulf %39, %38 : vector<32x128xf32>
    %41 = arith.addf %32, %40 : vector<32x128xf32>
    %c7_i32 = arith.constant 7 : i32
    %42 = tpu.dynamic_rotate %11 by %c7_i32 dim 1 : vector<32x128xf32>, i32 -> vector<32x128xf32>
    %43 = vector.extract_strided_slice %17 {offsets = [0, 2], sizes = [32, 1], strides = [1, 1]} : vector<32x9xf32> to vector<32x1xf32>
    %c2 = arith.constant 2 : index
    %c0_21 = arith.constant 0 : index
    %c0_22 = arith.constant 0 : index
    %44 = vector.load %arg8[%c2, %c0_21, %c0_22] : memref<9x1x128xf32, #tpu.memory_space<vmem>>, vector<1x1x128xf32>
    %45 = vector.shape_cast %44 : vector<1x1x128xf32> to vector<1x128xf32>
    %46 = vector.broadcast %45 : vector<1x128xf32> to vector<32x128xf32>
    %47 = arith.mulf %42, %46 : vector<32x128xf32>
    %48 = vector.broadcast %43 : vector<32x1xf32> to vector<32x128xf32>
    %49 = arith.mulf %48, %47 : vector<32x128xf32>
    %50 = arith.addf %41, %49 : vector<32x128xf32>
    %c1_i32 = arith.constant 1 : i32
    %51 = tpu.dynamic_rotate %11 by %c1_i32 dim 1 : vector<32x128xf32>, i32 -> vector<32x128xf32>
    %52 = vector.extract_strided_slice %17 {offsets = [0, 3], sizes = [32, 1], strides = [1, 1]} : vector<32x9xf32> to vector<32x1xf32>
    %c3 = arith.constant 3 : index
    %c0_23 = arith.constant 0 : index
    %c0_24 = arith.constant 0 : index
    %53 = vector.load %arg8[%c3, %c0_23, %c0_24] : memref<9x1x128xf32, #tpu.memory_space<vmem>>, vector<1x1x128xf32>
    %54 = vector.shape_cast %53 : vector<1x1x128xf32> to vector<1x128xf32>
    %55 = vector.broadcast %54 : vector<1x128xf32> to vector<32x128xf32>
    %56 = arith.mulf %51, %55 : vector<32x128xf32>
    %57 = vector.broadcast %52 : vector<32x1xf32> to vector<32x128xf32>
    %58 = arith.mulf %57, %56 : vector<32x128xf32>
    %59 = arith.addf %50, %58 : vector<32x128xf32>
    %c127_i32 = arith.constant 127 : i32
    %60 = tpu.dynamic_rotate %11 by %c127_i32 dim 1 : vector<32x128xf32>, i32 -> vector<32x128xf32>
    %61 = vector.extract_strided_slice %17 {offsets = [0, 5], sizes = [32, 1], strides = [1, 1]} : vector<32x9xf32> to vector<32x1xf32>
    %c5 = arith.constant 5 : index
    %c0_25 = arith.constant 0 : index
    %c0_26 = arith.constant 0 : index
    %62 = vector.load %arg8[%c5, %c0_25, %c0_26] : memref<9x1x128xf32, #tpu.memory_space<vmem>>, vector<1x1x128xf32>
    %63 = vector.shape_cast %62 : vector<1x1x128xf32> to vector<1x128xf32>
    %64 = vector.broadcast %63 : vector<1x128xf32> to vector<32x128xf32>
    %65 = arith.mulf %60, %64 : vector<32x128xf32>
    %66 = vector.broadcast %61 : vector<32x1xf32> to vector<32x128xf32>
    %67 = arith.mulf %66, %65 : vector<32x128xf32>
    %68 = arith.addf %59, %67 : vector<32x128xf32>
    %c121_i32 = arith.constant 121 : i32
    %69 = tpu.dynamic_rotate %11 by %c121_i32 dim 1 : vector<32x128xf32>, i32 -> vector<32x128xf32>
    %70 = vector.extract_strided_slice %17 {offsets = [0, 6], sizes = [32, 1], strides = [1, 1]} : vector<32x9xf32> to vector<32x1xf32>
    %c6 = arith.constant 6 : index
    %c0_27 = arith.constant 0 : index
    %c0_28 = arith.constant 0 : index
    %71 = vector.load %arg8[%c6, %c0_27, %c0_28] : memref<9x1x128xf32, #tpu.memory_space<vmem>>, vector<1x1x128xf32>
    %72 = vector.shape_cast %71 : vector<1x1x128xf32> to vector<1x128xf32>
    %73 = vector.broadcast %72 : vector<1x128xf32> to vector<32x128xf32>
    %74 = arith.mulf %69, %73 : vector<32x128xf32>
    %75 = vector.broadcast %70 : vector<32x1xf32> to vector<32x128xf32>
    %76 = arith.mulf %75, %74 : vector<32x128xf32>
    %77 = arith.addf %68, %76 : vector<32x128xf32>
    %c120_i32 = arith.constant 120 : i32
    %78 = tpu.dynamic_rotate %11 by %c120_i32 dim 1 : vector<32x128xf32>, i32 -> vector<32x128xf32>
    %79 = vector.extract_strided_slice %17 {offsets = [0, 7], sizes = [32, 1], strides = [1, 1]} : vector<32x9xf32> to vector<32x1xf32>
    %c7 = arith.constant 7 : index
    %c0_29 = arith.constant 0 : index
    %c0_30 = arith.constant 0 : index
    %80 = vector.load %arg8[%c7, %c0_29, %c0_30] : memref<9x1x128xf32, #tpu.memory_space<vmem>>, vector<1x1x128xf32>
    %81 = vector.shape_cast %80 : vector<1x1x128xf32> to vector<1x128xf32>
    %82 = vector.broadcast %81 : vector<1x128xf32> to vector<32x128xf32>
    %83 = arith.mulf %78, %82 : vector<32x128xf32>
    %84 = vector.broadcast %79 : vector<32x1xf32> to vector<32x128xf32>
    %85 = arith.mulf %84, %83 : vector<32x128xf32>
    %86 = arith.addf %77, %85 : vector<32x128xf32>
    %c119_i32 = arith.constant 119 : i32
    %87 = tpu.dynamic_rotate %11 by %c119_i32 dim 1 : vector<32x128xf32>, i32 -> vector<32x128xf32>
    %88 = vector.extract_strided_slice %17 {offsets = [0, 8], sizes = [32, 1], strides = [1, 1]} : vector<32x9xf32> to vector<32x1xf32>
    %c8 = arith.constant 8 : index
    %c0_31 = arith.constant 0 : index
    %c0_32 = arith.constant 0 : index
    %89 = vector.load %arg8[%c8, %c0_31, %c0_32] : memref<9x1x128xf32, #tpu.memory_space<vmem>>, vector<1x1x128xf32>
    %90 = vector.shape_cast %89 : vector<1x1x128xf32> to vector<1x128xf32>
    %91 = vector.broadcast %90 : vector<1x128xf32> to vector<32x128xf32>
    %92 = arith.mulf %87, %91 : vector<32x128xf32>
    %93 = vector.broadcast %88 : vector<32x1xf32> to vector<32x128xf32>
    %94 = arith.mulf %93, %92 : vector<32x128xf32>
    %95 = arith.addf %86, %94 : vector<32x128xf32>
    %96 = vector.extract_strided_slice %5 {offsets = [32, 0], sizes = [16, 9], strides = [1, 1]} : vector<48x9xf32> to vector<16x9xf32>
    %97 = vector.extract_strided_slice %6 {offsets = [32, 0], sizes = [16, 1], strides = [1, 1]} : vector<48x1xf32> to vector<16x1xf32>
    %98 = vector.extract_strided_slice %96 {offsets = [0, 4], sizes = [16, 1], strides = [1, 1]} : vector<16x9xf32> to vector<16x1xf32>
    %99 = vector.broadcast %98 : vector<16x1xf32> to vector<16x128xf32>
    %100 = arith.mulf %99, %16 : vector<16x128xf32>
    %101 = vector.broadcast %97 : vector<16x1xf32> to vector<16x128xf32>
    %102 = arith.addf %101, %100 : vector<16x128xf32>
    %c9_i32_33 = arith.constant 9 : i32
    %103 = tpu.dynamic_rotate %16 by %c9_i32_33 dim 1 : vector<16x128xf32>, i32 -> vector<16x128xf32>
    %104 = vector.extract_strided_slice %96 {offsets = [0, 0], sizes = [16, 1], strides = [1, 1]} : vector<16x9xf32> to vector<16x1xf32>
    %c0_34 = arith.constant 0 : index
    %c0_35 = arith.constant 0 : index
    %c0_36 = arith.constant 0 : index
    %105 = vector.load %arg8[%c0_34, %c0_35, %c0_36] : memref<9x1x128xf32, #tpu.memory_space<vmem>>, vector<1x1x128xf32>
    %106 = vector.shape_cast %105 : vector<1x1x128xf32> to vector<1x128xf32>
    %107 = vector.broadcast %106 : vector<1x128xf32> to vector<16x128xf32>
    %108 = arith.mulf %103, %107 : vector<16x128xf32>
    %109 = vector.broadcast %104 : vector<16x1xf32> to vector<16x128xf32>
    %110 = arith.mulf %109, %108 : vector<16x128xf32>
    %111 = arith.addf %102, %110 : vector<16x128xf32>
    %c8_i32_37 = arith.constant 8 : i32
    %112 = tpu.dynamic_rotate %16 by %c8_i32_37 dim 1 : vector<16x128xf32>, i32 -> vector<16x128xf32>
    %113 = vector.extract_strided_slice %96 {offsets = [0, 1], sizes = [16, 1], strides = [1, 1]} : vector<16x9xf32> to vector<16x1xf32>
    %c1_38 = arith.constant 1 : index
    %c0_39 = arith.constant 0 : index
    %c0_40 = arith.constant 0 : index
    %114 = vector.load %arg8[%c1_38, %c0_39, %c0_40] : memref<9x1x128xf32, #tpu.memory_space<vmem>>, vector<1x1x128xf32>
    %115 = vector.shape_cast %114 : vector<1x1x128xf32> to vector<1x128xf32>
    %116 = vector.broadcast %115 : vector<1x128xf32> to vector<16x128xf32>
    %117 = arith.mulf %112, %116 : vector<16x128xf32>
    %118 = vector.broadcast %113 : vector<16x1xf32> to vector<16x128xf32>
    %119 = arith.mulf %118, %117 : vector<16x128xf32>
    %120 = arith.addf %111, %119 : vector<16x128xf32>
    %c7_i32_41 = arith.constant 7 : i32
    %121 = tpu.dynamic_rotate %16 by %c7_i32_41 dim 1 : vector<16x128xf32>, i32 -> vector<16x128xf32>
    %122 = vector.extract_strided_slice %96 {offsets = [0, 2], sizes = [16, 1], strides = [1, 1]} : vector<16x9xf32> to vector<16x1xf32>
    %c2_42 = arith.constant 2 : index
    %c0_43 = arith.constant 0 : index
    %c0_44 = arith.constant 0 : index
    %123 = vector.load %arg8[%c2_42, %c0_43, %c0_44] : memref<9x1x128xf32, #tpu.memory_space<vmem>>, vector<1x1x128xf32>
    %124 = vector.shape_cast %123 : vector<1x1x128xf32> to vector<1x128xf32>
    %125 = vector.broadcast %124 : vector<1x128xf32> to vector<16x128xf32>
    %126 = arith.mulf %121, %125 : vector<16x128xf32>
    %127 = vector.broadcast %122 : vector<16x1xf32> to vector<16x128xf32>
    %128 = arith.mulf %127, %126 : vector<16x128xf32>
    %129 = arith.addf %120, %128 : vector<16x128xf32>
    %c1_i32_45 = arith.constant 1 : i32
    %130 = tpu.dynamic_rotate %16 by %c1_i32_45 dim 1 : vector<16x128xf32>, i32 -> vector<16x128xf32>
    %131 = vector.extract_strided_slice %96 {offsets = [0, 3], sizes = [16, 1], strides = [1, 1]} : vector<16x9xf32> to vector<16x1xf32>
    %c3_46 = arith.constant 3 : index
    %c0_47 = arith.constant 0 : index
    %c0_48 = arith.constant 0 : index
    %132 = vector.load %arg8[%c3_46, %c0_47, %c0_48] : memref<9x1x128xf32, #tpu.memory_space<vmem>>, vector<1x1x128xf32>
    %133 = vector.shape_cast %132 : vector<1x1x128xf32> to vector<1x128xf32>
    %134 = vector.broadcast %133 : vector<1x128xf32> to vector<16x128xf32>
    %135 = arith.mulf %130, %134 : vector<16x128xf32>
    %136 = vector.broadcast %131 : vector<16x1xf32> to vector<16x128xf32>
    %137 = arith.mulf %136, %135 : vector<16x128xf32>
    %138 = arith.addf %129, %137 : vector<16x128xf32>
    %c127_i32_49 = arith.constant 127 : i32
    %139 = tpu.dynamic_rotate %16 by %c127_i32_49 dim 1 : vector<16x128xf32>, i32 -> vector<16x128xf32>
    %140 = vector.extract_strided_slice %96 {offsets = [0, 5], sizes = [16, 1], strides = [1, 1]} : vector<16x9xf32> to vector<16x1xf32>
    %c5_50 = arith.constant 5 : index
    %c0_51 = arith.constant 0 : index
    %c0_52 = arith.constant 0 : index
    %141 = vector.load %arg8[%c5_50, %c0_51, %c0_52] : memref<9x1x128xf32, #tpu.memory_space<vmem>>, vector<1x1x128xf32>
    %142 = vector.shape_cast %141 : vector<1x1x128xf32> to vector<1x128xf32>
    %143 = vector.broadcast %142 : vector<1x128xf32> to vector<16x128xf32>
    %144 = arith.mulf %139, %143 : vector<16x128xf32>
    %145 = vector.broadcast %140 : vector<16x1xf32> to vector<16x128xf32>
    %146 = arith.mulf %145, %144 : vector<16x128xf32>
    %147 = arith.addf %138, %146 : vector<16x128xf32>
    %c121_i32_53 = arith.constant 121 : i32
    %148 = tpu.dynamic_rotate %16 by %c121_i32_53 dim 1 : vector<16x128xf32>, i32 -> vector<16x128xf32>
    %149 = vector.extract_strided_slice %96 {offsets = [0, 6], sizes = [16, 1], strides = [1, 1]} : vector<16x9xf32> to vector<16x1xf32>
    %c6_54 = arith.constant 6 : index
    %c0_55 = arith.constant 0 : index
    %c0_56 = arith.constant 0 : index
    %150 = vector.load %arg8[%c6_54, %c0_55, %c0_56] : memref<9x1x128xf32, #tpu.memory_space<vmem>>, vector<1x1x128xf32>
    %151 = vector.shape_cast %150 : vector<1x1x128xf32> to vector<1x128xf32>
    %152 = vector.broadcast %151 : vector<1x128xf32> to vector<16x128xf32>
    %153 = arith.mulf %148, %152 : vector<16x128xf32>
    %154 = vector.broadcast %149 : vector<16x1xf32> to vector<16x128xf32>
    %155 = arith.mulf %154, %153 : vector<16x128xf32>
    %156 = arith.addf %147, %155 : vector<16x128xf32>
    %c120_i32_57 = arith.constant 120 : i32
    %157 = tpu.dynamic_rotate %16 by %c120_i32_57 dim 1 : vector<16x128xf32>, i32 -> vector<16x128xf32>
    %158 = vector.extract_strided_slice %96 {offsets = [0, 7], sizes = [16, 1], strides = [1, 1]} : vector<16x9xf32> to vector<16x1xf32>
    %c7_58 = arith.constant 7 : index
    %c0_59 = arith.constant 0 : index
    %c0_60 = arith.constant 0 : index
    %159 = vector.load %arg8[%c7_58, %c0_59, %c0_60] : memref<9x1x128xf32, #tpu.memory_space<vmem>>, vector<1x1x128xf32>
    %160 = vector.shape_cast %159 : vector<1x1x128xf32> to vector<1x128xf32>
    %161 = vector.broadcast %160 : vector<1x128xf32> to vector<16x128xf32>
    %162 = arith.mulf %157, %161 : vector<16x128xf32>
    %163 = vector.broadcast %158 : vector<16x1xf32> to vector<16x128xf32>
    %164 = arith.mulf %163, %162 : vector<16x128xf32>
    %165 = arith.addf %156, %164 : vector<16x128xf32>
    %c119_i32_61 = arith.constant 119 : i32
    %166 = tpu.dynamic_rotate %16 by %c119_i32_61 dim 1 : vector<16x128xf32>, i32 -> vector<16x128xf32>
    %167 = vector.extract_strided_slice %96 {offsets = [0, 8], sizes = [16, 1], strides = [1, 1]} : vector<16x9xf32> to vector<16x1xf32>
    %c8_62 = arith.constant 8 : index
    %c0_63 = arith.constant 0 : index
    %c0_64 = arith.constant 0 : index
    %168 = vector.load %arg8[%c8_62, %c0_63, %c0_64] : memref<9x1x128xf32, #tpu.memory_space<vmem>>, vector<1x1x128xf32>
    %169 = vector.shape_cast %168 : vector<1x1x128xf32> to vector<1x128xf32>
    %170 = vector.broadcast %169 : vector<1x128xf32> to vector<16x128xf32>
    %171 = arith.mulf %166, %170 : vector<16x128xf32>
    %172 = vector.broadcast %167 : vector<16x1xf32> to vector<16x128xf32>
    %173 = arith.mulf %172, %171 : vector<16x128xf32>
    %174 = arith.addf %165, %173 : vector<16x128xf32>
    %175 = vector.extract_strided_slice %95 {offsets = [0, 0], sizes = [16, 128], strides = [1, 1]} : vector<32x128xf32> to vector<16x128xf32>
    %176 = vector.extract_strided_slice %95 {offsets = [16, 0], sizes = [16, 128], strides = [1, 1]} : vector<32x128xf32> to vector<16x128xf32>
    %c0_65 = arith.constant 0 : index
    %c0_66 = arith.constant 0 : index
    %177 = vector.load %arg9[%c0_65, %c0_66] : memref<16x1xf32, #tpu.memory_space<vmem>>, vector<16x1xf32>
    %c0_67 = arith.constant 0 : index
    %c0_68 = arith.constant 0 : index
    %178 = vector.load %arg10[%c0_67, %c0_68] : memref<16x16xf32, #tpu.memory_space<vmem>>, vector<16x16xf32>
    %179 = vector.extract_strided_slice %175 {offsets = [0, 0], sizes = [16, 64], strides = [1, 1]} : vector<16x128xf32> to vector<16x64xf32>
    %180 = vector.extract_strided_slice %176 {offsets = [0, 0], sizes = [16, 64], strides = [1, 1]} : vector<16x128xf32> to vector<16x64xf32>
    %181 = vector.extract_strided_slice %174 {offsets = [0, 0], sizes = [16, 64], strides = [1, 1]} : vector<16x128xf32> to vector<16x64xf32>
    %182 = arith.mulf %179, %179 : vector<16x64xf32>
    %cst_69 = arith.constant dense<0.000000e+00> : vector<16xf32>
    %183 = vector.multi_reduction <add>, %182, %cst_69 [1] : vector<16x64xf32> to vector<16xf32>
    %184 = vector.shape_cast %183 : vector<16xf32> to vector<16x1xf32>
    %cst_70 = arith.constant 1.000000e-24 : f32
    %185 = vector.broadcast %cst_70 : f32 to vector<16x1xf32>
    %186 = arith.maximumf %184, %185 : vector<16x1xf32>
    %187 = math.rsqrt %186 : vector<16x1xf32>
    %188 = vector.broadcast %187 : vector<16x1xf32> to vector<16x64xf32>
    %189 = arith.mulf %179, %188 : vector<16x64xf32>
    %190 = arith.mulf %181, %181 : vector<16x64xf32>
    %cst_71 = arith.constant dense<0.000000e+00> : vector<16xf32>
    %191 = vector.multi_reduction <add>, %190, %cst_71 [1] : vector<16x64xf32> to vector<16xf32>
    %192 = vector.shape_cast %191 : vector<16xf32> to vector<16x1xf32>
    %cst_72 = arith.constant 1.000000e-24 : f32
    %193 = vector.broadcast %cst_72 : f32 to vector<16x1xf32>
    %194 = arith.maximumf %192, %193 : vector<16x1xf32>
    %195 = math.rsqrt %194 : vector<16x1xf32>
    %196 = vector.broadcast %195 : vector<16x1xf32> to vector<16x64xf32>
    %197 = arith.mulf %181, %196 : vector<16x64xf32>
    %198 = vector.broadcast %177 : vector<16x1xf32> to vector<16x64xf32>
    %199 = arith.mulf %197, %198 : vector<16x64xf32>
    %200 = arith.truncf %199 : vector<16x64xf32> to vector<16x64xbf16>
    %201 = arith.truncf %189 : vector<16x64xf32> to vector<16x64xbf16>
    %cst_73 = arith.constant dense<0.000000e+00> : vector<16x16xf32>
    %202 = tpu.matmul %200, %201, %cst_73 {dimension_numbers = #tpu.dot_dimension_numbers<[1], [1], [0], [0], [0, 0, 1, 0], [], []>} : vector<16x64xbf16>, vector<16x64xbf16>, vector<16x16xf32> -> vector<16x16xf32>
    %203 = arith.addf %202, %178 : vector<16x16xf32>
    %cst_74 = arith.constant dense<0xFF800000> : vector<16xf32>
    %204 = vector.multi_reduction <maximumf>, %203, %cst_74 [1] : vector<16x16xf32> to vector<16xf32>
    %205 = vector.shape_cast %204 : vector<16xf32> to vector<16x1xf32>
    %206 = vector.broadcast %205 : vector<16x1xf32> to vector<16x16xf32>
    %207 = arith.subf %203, %206 : vector<16x16xf32>
    %208 = math.exp %207 : vector<16x16xf32>
    %cst_75 = arith.constant dense<0.000000e+00> : vector<16xf32>
    %209 = vector.multi_reduction <add>, %208, %cst_75 [1] : vector<16x16xf32> to vector<16xf32>
    %210 = vector.shape_cast %209 : vector<16xf32> to vector<16x1xf32>
    %211 = tpu.reciprocal %210 {approx = true} : vector<16x1xf32> -> vector<16x1xf32>
    %212 = vector.broadcast %211 : vector<16x1xf32> to vector<16x16xf32>
    %213 = arith.mulf %208, %212 : vector<16x16xf32>
    %214 = arith.truncf %213 : vector<16x16xf32> to vector<16x16xbf16>
    %215 = arith.truncf %180 : vector<16x64xf32> to vector<16x64xbf16>
    %cst_76 = arith.constant dense<0.000000e+00> : vector<16x64xf32>
    %216 = tpu.matmul %214, %215, %cst_76 {dimension_numbers = #tpu.dot_dimension_numbers<[1], [0], [0], [1], [0, 0, 1, 1], [], []>} : vector<16x16xbf16>, vector<16x64xbf16>, vector<16x64xf32> -> vector<16x64xf32>
    %217 = vector.extract_strided_slice %175 {offsets = [0, 64], sizes = [16, 64], strides = [1, 1]} : vector<16x128xf32> to vector<16x64xf32>
    %218 = vector.extract_strided_slice %176 {offsets = [0, 64], sizes = [16, 64], strides = [1, 1]} : vector<16x128xf32> to vector<16x64xf32>
    %219 = vector.extract_strided_slice %174 {offsets = [0, 64], sizes = [16, 64], strides = [1, 1]} : vector<16x128xf32> to vector<16x64xf32>
    %220 = arith.mulf %217, %217 : vector<16x64xf32>
    %cst_77 = arith.constant dense<0.000000e+00> : vector<16xf32>
    %221 = vector.multi_reduction <add>, %220, %cst_77 [1] : vector<16x64xf32> to vector<16xf32>
    %222 = vector.shape_cast %221 : vector<16xf32> to vector<16x1xf32>
    %cst_78 = arith.constant 1.000000e-24 : f32
    %223 = vector.broadcast %cst_78 : f32 to vector<16x1xf32>
    %224 = arith.maximumf %222, %223 : vector<16x1xf32>
    %225 = math.rsqrt %224 : vector<16x1xf32>
    %226 = vector.broadcast %225 : vector<16x1xf32> to vector<16x64xf32>
    %227 = arith.mulf %217, %226 : vector<16x64xf32>
    %228 = arith.mulf %219, %219 : vector<16x64xf32>
    %cst_79 = arith.constant dense<0.000000e+00> : vector<16xf32>
    %229 = vector.multi_reduction <add>, %228, %cst_79 [1] : vector<16x64xf32> to vector<16xf32>
    %230 = vector.shape_cast %229 : vector<16xf32> to vector<16x1xf32>
    %cst_80 = arith.constant 1.000000e-24 : f32
    %231 = vector.broadcast %cst_80 : f32 to vector<16x1xf32>
    %232 = arith.maximumf %230, %231 : vector<16x1xf32>
    %233 = math.rsqrt %232 : vector<16x1xf32>
    %234 = vector.broadcast %233 : vector<16x1xf32> to vector<16x64xf32>
    %235 = arith.mulf %219, %234 : vector<16x64xf32>
    %236 = vector.broadcast %177 : vector<16x1xf32> to vector<16x64xf32>
    %237 = arith.mulf %235, %236 : vector<16x64xf32>
    %238 = arith.truncf %237 : vector<16x64xf32> to vector<16x64xbf16>
    %239 = arith.truncf %227 : vector<16x64xf32> to vector<16x64xbf16>
    %cst_81 = arith.constant dense<0.000000e+00> : vector<16x16xf32>
    %240 = tpu.matmul %238, %239, %cst_81 {dimension_numbers = #tpu.dot_dimension_numbers<[1], [1], [0], [0], [0, 0, 1, 0], [], []>} : vector<16x64xbf16>, vector<16x64xbf16>, vector<16x16xf32> -> vector<16x16xf32>
    %241 = arith.addf %240, %178 : vector<16x16xf32>
    %cst_82 = arith.constant dense<0xFF800000> : vector<16xf32>
    %242 = vector.multi_reduction <maximumf>, %241, %cst_82 [1] : vector<16x16xf32> to vector<16xf32>
    %243 = vector.shape_cast %242 : vector<16xf32> to vector<16x1xf32>
    %244 = vector.broadcast %243 : vector<16x1xf32> to vector<16x16xf32>
    %245 = arith.subf %241, %244 : vector<16x16xf32>
    %246 = math.exp %245 : vector<16x16xf32>
    %cst_83 = arith.constant dense<0.000000e+00> : vector<16xf32>
    %247 = vector.multi_reduction <add>, %246, %cst_83 [1] : vector<16x16xf32> to vector<16xf32>
    %248 = vector.shape_cast %247 : vector<16xf32> to vector<16x1xf32>
    %249 = tpu.reciprocal %248 {approx = true} : vector<16x1xf32> -> vector<16x1xf32>
    %250 = vector.broadcast %249 : vector<16x1xf32> to vector<16x16xf32>
    %251 = arith.mulf %246, %250 : vector<16x16xf32>
    %252 = arith.truncf %251 : vector<16x16xf32> to vector<16x16xbf16>
    %253 = arith.truncf %218 : vector<16x64xf32> to vector<16x64xbf16>
    %cst_84 = arith.constant dense<0.000000e+00> : vector<16x64xf32>
    %254 = tpu.matmul %252, %253, %cst_84 {dimension_numbers = #tpu.dot_dimension_numbers<[1], [0], [0], [1], [0, 0, 1, 1], [], []>} : vector<16x16xbf16>, vector<16x64xbf16>, vector<16x64xf32> -> vector<16x64xf32>
    %255 = tpu.concatenate %216, %254 in 1 : vector<16x64xf32>, vector<16x64xf32> -> vector<16x128xf32>
    %c0_85 = arith.constant 0 : index
    %c0_86 = arith.constant 0 : index
    %256 = vector.load %arg11[%c0_85, %c0_86] : memref<16x16xbf16, #tpu.memory_space<vmem>>, vector<16x16xbf16>
    %257 = arith.truncf %255 : vector<16x128xf32> to vector<16x128xbf16>
    %cst_87 = arith.constant dense<0.000000e+00> : vector<16x128xf32>
    %258 = tpu.matmul %256, %257, %cst_87 {dimension_numbers = #tpu.dot_dimension_numbers<[1], [0], [0], [1], [0, 0, 1, 1], [], []>} : vector<16x16xbf16>, vector<16x128xbf16>, vector<16x128xf32> -> vector<16x128xf32>
    %c0_88 = arith.constant 0 : index
    %c0_89 = arith.constant 0 : index
    %259 = vector.load %arg12[%c0_88, %c0_89] : memref<16x1xf32, #tpu.memory_space<vmem>>, vector<16x1xf32>
    %260 = vector.broadcast %259 : vector<16x1xf32> to vector<16x128xf32>
    %261 = arith.addf %258, %260 : vector<16x128xf32>
    %c0_90 = arith.constant 0 : index
    %c0_91 = arith.constant 0 : index
    %c0_92 = arith.constant 0 : index
    %262 = vector.load %arg13[%c0_90, %c0_91, %c0_92] : memref<1x16x128xf32, #tpu.memory_space<vmem>>, vector<1x16x128xf32>
    %263 = vector.shape_cast %262 : vector<1x16x128xf32> to vector<16x128xf32>
    %264 = vector.shape_cast %261 : vector<16x128xf32> to vector<1x16x128xf32>
    tpu.vector_store %arg13[%c0_90, %c0_91, %c0_92], %264 {strides = array<i32>} : memref<1x16x128xf32, #tpu.memory_space<vmem>>, vector<1x16x128xf32>,
    return
  }
  func.func @transform_0(%arg0: i32) -> (i32, i32, i32) {
    %c0_i32 = arith.constant 0 : i32
    %c0_i32_0 = arith.constant 0 : i32
    %c0_i32_1 = arith.constant 0 : i32
    return %arg0, %c0_i32, %c0_i32_0 : i32, i32, i32
  }
  func.func @transform_1(%arg0: i32) -> (i32, i32, i32) {
    %c0_i32 = arith.constant 0 : i32
    %c0_i32_0 = arith.constant 0 : i32
    %c0_i32_1 = arith.constant 0 : i32
    return %arg0, %c0_i32, %c0_i32_0 : i32, i32, i32
  }
  func.func @transform_2(%arg0: i32) -> (i32, i32) {
    %c0_i32 = arith.constant 0 : i32
    %c0_i32_0 = arith.constant 0 : i32
    %c0_i32_1 = arith.constant 0 : i32
    return %c0_i32, %c0_i32_0 : i32, i32
  }
  func.func @transform_3(%arg0: i32) -> (i32, i32) {
    %c0_i32 = arith.constant 0 : i32
    %c0_i32_0 = arith.constant 0 : i32
    %c0_i32_1 = arith.constant 0 : i32
    return %c0_i32, %c0_i32_0 : i32, i32
  }
  func.func @transform_4(%arg0: i32) -> (i32, i32) {
    %c0_i32 = arith.constant 0 : i32
    %c0_i32_0 = arith.constant 0 : i32
    %c0_i32_1 = arith.constant 0 : i32
    return %c0_i32, %c0_i32_0 : i32, i32
  }
  func.func @transform_5(%arg0: i32) -> (i32, i32) {
    %c0_i32 = arith.constant 0 : i32
    %c0_i32_0 = arith.constant 0 : i32
    %c0_i32_1 = arith.constant 0 : i32
    return %c0_i32, %c0_i32_0 : i32, i32
  }
  func.func @transform_6(%arg0: i32) -> (i32, i32) {
    %c0_i32 = arith.constant 0 : i32
    %c0_i32_0 = arith.constant 0 : i32
    %c0_i32_1 = arith.constant 0 : i32
    return %c0_i32, %c0_i32_0 : i32, i32
  }
  func.func @transform_7(%arg0: i32) -> (i32, i32, i32) {
    %c0_i32 = arith.constant 0 : i32
    %c0_i32_0 = arith.constant 0 : i32
    %c0_i32_1 = arith.constant 0 : i32
    %c0_i32_2 = arith.constant 0 : i32
    return %c0_i32, %c0_i32_0, %c0_i32_1 : i32, i32, i32
  }
  func.func @transform_8(%arg0: i32) -> (i32, i32) {
    %c0_i32 = arith.constant 0 : i32
    %c0_i32_0 = arith.constant 0 : i32
    %c0_i32_1 = arith.constant 0 : i32
    return %c0_i32, %c0_i32_0 : i32, i32
  }
  func.func @transform_9(%arg0: i32) -> (i32, i32) {
    %c0_i32 = arith.constant 0 : i32
    %c0_i32_0 = arith.constant 0 : i32
    %c0_i32_1 = arith.constant 0 : i32
    return %c0_i32, %c0_i32_0 : i32, i32
  }
  func.func @transform_10(%arg0: i32) -> (i32, i32) {
    %c0_i32 = arith.constant 0 : i32
    %c0_i32_0 = arith.constant 0 : i32
    %c0_i32_1 = arith.constant 0 : i32
    return %c0_i32, %c0_i32_0 : i32, i32
  }
  func.func @transform_11(%arg0: i32) -> (i32, i32) {
    %c0_i32 = arith.constant 0 : i32
    %c0_i32_0 = arith.constant 0 : i32
    %c0_i32_1 = arith.constant 0 : i32
    return %c0_i32, %c0_i32_0 : i32, i32
  }
  func.func @transform_12(%arg0: i32) -> (i32, i32, i32) {
    %c0_i32 = arith.constant 0 : i32
    %c0_i32_0 = arith.constant 0 : i32
    %c0_i32_1 = arith.constant 0 : i32
    return %arg0, %c0_i32, %c0_i32_0 : i32, i32, i32
  }
}

</mosaic_0001>

<llo_original>
// kernel: attention1_forward.1
$region0: #{attention1_forward.1}
  #allocation0 [shape = 'u32[]', space=smem, size = 0x4, offset = 0x4, fixed_abs, tag = 'smem constant byte address 0x4 - core index']
  #allocation1 [shape = 'u32[144,128]{1,0:T(1,128)}', space=vmem, size = 0x12000, scoped, tag = 'internal scratch']
  %s0 = inlined_call_operand.vmem [shape: bf16[1,16,128], index: 0, kind: input, shape index: {}]
  %s1 = inlined_call_operand.vmem [shape: bf16[1,16,128], index: 1, kind: input, shape index: {}]
  %s2 = inlined_call_operand.vmem [shape: bf16[32,16], index: 2, kind: input, shape index: {}]
  %s3 = inlined_call_operand.vmem [shape: bf16[16,16], index: 3, kind: input, shape index: {}]
  %s4 = inlined_call_operand.vmem [shape: f32[48,1], index: 4, kind: input, shape index: {}]
  %s5 = inlined_call_operand.vmem [shape: f32[48,9], index: 5, kind: input, shape index: {}]
  %s6 = inlined_call_operand.vmem [shape: f32[48,1], index: 6, kind: input, shape index: {}]
  %s7 = inlined_call_operand.vmem [shape: f32[9,1,128], index: 7, kind: input, shape index: {}]
  %s8 = inlined_call_operand.vmem [shape: f32[16,1], index: 8, kind: input, shape index: {}]
  %s9 = inlined_call_operand.vmem [shape: f32[16,16], index: 9, kind: input, shape index: {}]
  %s10 = inlined_call_operand.vmem [shape: bf16[16,16], index: 10, kind: input, shape index: {}]
  %s11 = inlined_call_operand.vmem [shape: f32[16,1], index: 11, kind: input, shape index: {}]
  %s12 = inlined_call_operand.vmem [shape: f32[1,16,128], index: 12, kind: output, shape index: {}]
  %s13 = sld [smem:[#allocation0]]
  $region58: #{attention1_forward.1} parent=0
    _
  %s15 = ssub.s32 1, %s13
  %s16 = scalar_select 0, %s15, %s13
  // Predicated region
  $region2: #{attention1_forward.1} parent=0 // pred_check
    _
  $region3: #{attention1_forward.1} parent=0 // pred_check_branch
    %18 = sbr.rel (0) target = $region5
  $region4: #{attention1_forward.1} parent=0 // pred_region
    _
  $region5: #{attention1_forward.1} parent=0 // pred_fallthru
    _
  // Predicated region
  $region6: #{attention1_forward.1} parent=0 // pred_check
    _
  $region7: #{attention1_forward.1} parent=0 // pred_check_branch
    %20 = sbr.rel (0) target = $region9
  $region8: #{attention1_forward.1} parent=0 // pred_region
    _
  $region9: #{attention1_forward.1} parent=0 // pred_fallthru
    _
  // Predicated region
  $region10: #{attention1_forward.1} parent=0 // pred_check
    _
  $region11: #{attention1_forward.1} parent=0 // pred_check_branch
    %22 = sbr.rel (0) target = $region13
  $region12: #{attention1_forward.1} parent=0 // pred_region
    _
  $region13: #{attention1_forward.1} parent=0 // pred_fallthru
    _
  // Predicated region
  $region14: #{attention1_forward.1} parent=0 // pred_check
    _
  $region15: #{attention1_forward.1} parent=0 // pred_check_branch
    %24 = sbr.rel (0) target = $region17
  $region16: #{attention1_forward.1} parent=0 // pred_region
    _
  $region17: #{attention1_forward.1} parent=0 // pred_fallthru
    _
  // Predicated region
  $region18: #{attention1_forward.1} parent=0 // pred_check
    _
  $region19: #{attention1_forward.1} parent=0 // pred_check_branch
    %26 = sbr.rel (0) target = $region21
  $region20: #{attention1_forward.1} parent=0 // pred_region
    _
  $region21: #{attention1_forward.1} parent=0 // pred_fallthru
    _
  // Predicated region
  $region22: #{attention1_forward.1} parent=0 // pred_check
    _
  $region23: #{attention1_forward.1} parent=0 // pred_check_branch
    %28 = sbr.rel (0) target = $region25
  $region24: #{attention1_forward.1} parent=0 // pred_region
    _
  $region25: #{attention1_forward.1} parent=0 // pred_fallthru
    _
  // Predicated region
  $region26: #{attention1_forward.1} parent=0 // pred_check
    _
  $region27: #{attention1_forward.1} parent=0 // pred_check_branch
    %30 = sbr.rel (0) target = $region29
  $region28: #{attention1_forward.1} parent=0 // pred_region
    _
  $region29: #{attention1_forward.1} parent=0 // pred_fallthru
    _
  // Predicated region
  $region30: #{attention1_forward.1} parent=0 // pred_check
    _
  $region31: #{attention1_forward.1} parent=0 // pred_check_branch
    %32 = sbr.rel (0) target = $region33
  $region32: #{attention1_forward.1} parent=0 // pred_region
    _
  $region33: #{attention1_forward.1} parent=0 // pred_fallthru
    _
  // Predicated region
  $region34: #{attention1_forward.1} parent=0 // pred_check
    _
  $region35: #{attention1_forward.1} parent=0 // pred_check_branch
    %34 = sbr.rel (0) target = $region37
  $region36: #{attention1_forward.1} parent=0 // pred_region
    _
  $region37: #{attention1_forward.1} parent=0 // pred_fallthru
    _
  // Predicated region
  $region38: #{attention1_forward.1} parent=0 // pred_check
    _
  $region39: #{attention1_forward.1} parent=0 // pred_check_branch
    %36 = sbr.rel (0) target = $region41
  $region40: #{attention1_forward.1} parent=0 // pred_region
    _
  $region41: #{attention1_forward.1} parent=0 // pred_fallthru
    _
  // Predicated region
  $region42: #{attention1_forward.1} parent=0 // pred_check
    _
  $region43: #{attention1_forward.1} parent=0 // pred_check_branch
    %38 = sbr.rel (0) target = $region45
  $region44: #{attention1_forward.1} parent=0 // pred_region
    _
  $region45: #{attention1_forward.1} parent=0 // pred_fallthru
    _
  // Predicated region
  $region46: #{attention1_forward.1} parent=0 // pred_check
    _
  $region47: #{attention1_forward.1} parent=0 // pred_check_branch
    %40 = sbr.rel (0) target = $region49
  $region48: #{attention1_forward.1} parent=0 // pred_region
    _
  $region49: #{attention1_forward.1} parent=0 // pred_fallthru
    _
  %v42 = vld [vmem:[%s0] sm:$0xf]
  %v43 = vld [vmem:[%s0 + $0x4] sm:$0xf]
  %v44 = vld [vmem:[%s1] sm:$0xf]
  %v45 = vld [vmem:[%s1 + $0x4] sm:$0xf]
  %v46 = vld [vmem:[%s4] sm:$0xff]
  %v47 = vld [vmem:[%s4 + $0x8] sm:$0xff]
  %v48 = vld [vmem:[%s4 + $0x10] sm:$0xff]
  %v49 = vld [vmem:[%s4 + $0x18] sm:$0xff]
  %v50 = vld [vmem:[%s4 + $0x20] sm:$0xff]
  %v51 = vld [vmem:[%s4 + $0x28] sm:$0xff]
  %v52 = vld [vmem:[%s5] sm:$0xff]
  %v53 = vld [vmem:[%s5 + $0x8] sm:$0xff]
  %v54 = vld [vmem:[%s5 + $0x10] sm:$0xff]
  %v55 = vld [vmem:[%s5 + $0x18] sm:$0xff]
  %v56 = vld [vmem:[%s5 + $0x20] sm:$0xff]
  %v57 = vld [vmem:[%s5 + $0x28] sm:$0xff]
  %v58 = vld [vmem:[%s6] sm:$0xff]
  %v59 = vld [vmem:[%s6 + $0x8] sm:$0xff]
  %v60 = vld [vmem:[%s6 + $0x10] sm:$0xff]
  %v61 = vld [vmem:[%s6 + $0x18] sm:$0xff]
  %v62 = vld [vmem:[%s6 + $0x20] sm:$0xff]
  %v63 = vld [vmem:[%s6 + $0x28] sm:$0xff]
  %v64 = vld [vmem:[%s2] sm:$0xf]
  %v65 = vld [vmem:[%s2 + $0x4] sm:$0xf]
  %v66 = vld [vmem:[%s2 + $0x8] sm:$0xf]
  %v67 = vld [vmem:[%s2 + $0xc] sm:$0xf]
  %69 = vset.pattern.permute.xlu0 0
  %70 = vperm.xlu0 %69, %v46
  %v71 = vpop.permute.xlu0 %70
  %74 = vset.pattern.permute.xlu0 0
  %75 = vperm.xlu0 %74, %v47
  %v76 = vpop.permute.xlu0 %75
  %79 = vset.pattern.permute.xlu0 0
  %80 = vperm.xlu0 %79, %v48
  %v81 = vpop.permute.xlu0 %80
  %84 = vset.pattern.permute.xlu0 0
  %85 = vperm.xlu0 %84, %v49
  %v86 = vpop.permute.xlu0 %85
  %v92 = vunpack.c.l.b16 %v64
  %v93 = vunpack.c.l.b16 %v65
  %v94 = vunpack.c.l.b16 %v66
  %v95 = vunpack.c.l.b16 %v67
  %v96 = vpack.c.b16 %v93, %v92
  %v97 = vpack.c.b16 %v95, %v94
  %v100 = vunpack.c.l.b16 %v42
  %v101 = vunpack.c.l.b16 %v43
  %v102 = vpack.c.b16 %v101, %v100
  %vm104 = vcmask 130048
  %v106 = vsel %vm104, %v96, 0
  %v109 = vsel %vm104, %v97, 0
  %111 = vmatprep.subr.bf16.mxu0 0
  %112 = vmatpush1.bf16.msra.mxu0 %v102
  %113 = vmatprep.subr.bf16.mxu0 0
  %114 = vmatpush1.bf16.msra.mxu0 0
  %115 = vmatprep.subr.bf16.mxu0 0
  %116 = vmatpush1.bf16.msra.mxu0 0
  %117 = vmatprep.subr.bf16.mxu0 0
  %118 = vmatpush1.bf16.msra.mxu0 0
  %119 = vmatprep.subr.bf16.mxu0 0
  %120 = vmatpush1.bf16.msra.mxu0 0
  %121 = vmatprep.subr.bf16.mxu0 0
  %122 = vmatpush1.bf16.msra.mxu0 0
  %123 = vmatprep.subr.bf16.mxu0 0
  %124 = vmatpush1.bf16.msra.mxu0 0
  %125 = vmatprep.subr.bf16.mxu0 0
  %126 = vmatpush1.bf16.msra.mxu0 0
  %127 = vmatprep.subr.bf16.mxu0 0
  %128 = vmatpush1.bf16.msra.mxu0 0
  %129 = vmatprep.subr.bf16.mxu0 0
  %130 = vmatpush1.bf16.msra.mxu0 0
  %131 = vmatprep.subr.bf16.mxu0 0
  %132 = vmatpush1.bf16.msra.mxu0 0
  %133 = vmatprep.subr.bf16.mxu0 0
  %134 = vmatpush1.bf16.msra.mxu0 0
  %135 = vmatprep.subr.bf16.mxu0 0
  %136 = vmatpush1.bf16.msra.mxu0 0
  %137 = vmatprep.subr.bf16.mxu0 0
  %138 = vmatpush1.bf16.msra.mxu0 0
  %139 = vmatprep.subr.bf16.mxu0 0
  %140 = vmatpush1.bf16.msra.mxu0 0
  %141 = vmatprep.subr.bf16.mxu0 0
  %142 = vmatpush1.bf16.msra.mxu0 0
  %143 = vmatprep.mubr.bf16.mxu0 0
  %144 = vmatmul.mubr.bf16.gmra.mrb[0].mxu0 %v106
  %v145 = vpop.f32.mrb[0].mxu0
  %v146 = vadd.f32 %v71, %v145
  %v147 = vpop.f32.mrb[0].mxu0
  %v148 = vpop.f32.mrb[0].mxu0
  %v149 = vadd.f32 %v76, %v148
  %v150 = vpop.f32.mrb[0].mxu0
  %151 = vmatprep.mubr.bf16.mxu0 0
  %152 = vmatmul.mubr.bf16.gmra.mrb[0].mxu0 %v109
  %v153 = vpop.f32.mrb[0].mxu0
  %v154 = vadd.f32 %v81, %v153
  %v155 = vpop.f32.mrb[0].mxu0
  %v156 = vpop.f32.mrb[0].mxu0
  %v157 = vadd.f32 %v86, %v156
  %v158 = vpop.f32.mrb[0].mxu0
  %159 = vdwg.mxu0
  %v160 = vld [vmem:[%s3] sm:$0xf]
  %v161 = vld [vmem:[%s3 + $0x4] sm:$0xf]
  %163 = vset.pattern.permute.xlu0 0
  %164 = vperm.xlu0 %163, %v50
  %v165 = vpop.permute.xlu0 %164
  %168 = vset.pattern.permute.xlu0 0
  %169 = vperm.xlu0 %168, %v51
  %v170 = vpop.permute.xlu0 %169
  %v174 = vunpack.c.l.b16 %v160
  %v175 = vunpack.c.l.b16 %v161
  %v176 = vpack.c.b16 %v175, %v174
  %v179 = vunpack.c.l.b16 %v44
  %v180 = vunpack.c.l.b16 %v45
  %v181 = vpack.c.b16 %v180, %v179
  %v184 = vsel %vm104, %v176, 0
  %186 = vmatprep.subr.bf16.mxu0 0
  %187 = vmatpush1.bf16.msra.mxu0 %v181
  %188 = vmatprep.subr.bf16.mxu0 0
  %189 = vmatpush1.bf16.msra.mxu0 0
  %190 = vmatprep.subr.bf16.mxu0 0
  %191 = vmatpush1.bf16.msra.mxu0 0
  %192 = vmatprep.subr.bf16.mxu0 0
  %193 = vmatpush1.bf16.msra.mxu0 0
  %194 = vmatprep.subr.bf16.mxu0 0
  %195 = vmatpush1.bf16.msra.mxu0 0
  %196 = vmatprep.subr.bf16.mxu0 0
  %197 = vmatpush1.bf16.msra.mxu0 0
  %198 = vmatprep.subr.bf16.mxu0 0
  %199 = vmatpush1.bf16.msra.mxu0 0
  %200 = vmatprep.subr.bf16.mxu0 0
  %201 = vmatpush1.bf16.msra.mxu0 0
  %202 = vmatprep.subr.bf16.mxu0 0
  %203 = vmatpush1.bf16.msra.mxu0 0
  %204 = vmatprep.subr.bf16.mxu0 0
  %205 = vmatpush1.bf16.msra.mxu0 0
  %206 = vmatprep.subr.bf16.mxu0 0
  %207 = vmatpush1.bf16.msra.mxu0 0
  %208 = vmatprep.subr.bf16.mxu0 0
  %209 = vmatpush1.bf16.msra.mxu0 0
  %210 = vmatprep.subr.bf16.mxu0 0
  %211 = vmatpush1.bf16.msra.mxu0 0
  %212 = vmatprep.subr.bf16.mxu0 0
  %213 = vmatpush1.bf16.msra.mxu0 0
  %214 = vmatprep.subr.bf16.mxu0 0
  %215 = vmatpush1.bf16.msra.mxu0 0
  %216 = vmatprep.subr.bf16.mxu0 0
  %217 = vmatpush1.bf16.msra.mxu0 0
  %218 = vmatprep.mubr.bf16.mxu0 0
  %219 = vmatmul.mubr.bf16.gmra.mrb[0].mxu0 %v184
  %v220 = vpop.f32.mrb[0].mxu0
  %v221 = vadd.f32 %v165, %v220
  %v222 = vpop.f32.mrb[0].mxu0
  %v223 = vpop.f32.mrb[0].mxu0
  %v224 = vadd.f32 %v170, %v223
  %v225 = vpop.f32.mrb[0].mxu0
  %226 = vdwg.mxu0
  %228 = vset.pattern.permute.xlu0 4
  %229 = vperm.xlu0 %228, %v52
  %v230 = vpop.permute.xlu0 %229
  %233 = vset.pattern.permute.xlu0 4
  %234 = vperm.xlu0 %233, %v53
  %v235 = vpop.permute.xlu0 %234
  %238 = vset.pattern.permute.xlu0 4
  %239 = vperm.xlu0 %238, %v54
  %v240 = vpop.permute.xlu0 %239
  %243 = vset.pattern.permute.xlu0 4
  %244 = vperm.xlu0 %243, %v55
  %v245 = vpop.permute.xlu0 %244
  %v247 = vmul.f32 %v230, %v146
  %v248 = vmul.f32 %v235, %v149
  %v249 = vmul.f32 %v240, %v154
  %v250 = vmul.f32 %v245, %v157
  %252 = vset.pattern.permute.xlu0 0
  %253 = vperm.xlu0 %252, %v58
  %v254 = vpop.permute.xlu0 %253
  %257 = vset.pattern.permute.xlu0 0
  %258 = vperm.xlu0 %257, %v59
  %v259 = vpop.permute.xlu0 %258
  %262 = vset.pattern.permute.xlu0 0
  %263 = vperm.xlu0 %262, %v60
  %v264 = vpop.permute.xlu0 %263
  %267 = vset.pattern.permute.xlu0 0
  %268 = vperm.xlu0 %267, %v61
  %v269 = vpop.permute.xlu0 %268
  %v271 = vadd.f32 %v254, %v247
  %v272 = vadd.f32 %v259, %v248
  %v273 = vadd.f32 %v264, %v249
  %v274 = vadd.f32 %v269, %v250
  %275 = vrot.lane.b32.xlu0 %v146, 9
  %v276 = vpop.permute.xlu0 %275
  %277 = vrot.lane.b32.xlu0 %v149, 9
  %v278 = vpop.permute.xlu0 %277
  %279 = vrot.lane.b32.xlu0 %v154, 9
  %v280 = vpop.permute.xlu0 %279
  %281 = vrot.lane.b32.xlu0 %v157, 9
  %v282 = vpop.permute.xlu0 %281
  %v283 = vld [vmem:[%s7] sm:$0x1]
  %v285 = vlaneseq
  %v286 = vshrl.u32 %v285, 7
  %v287 = vsub.s32 0, %v286
  %v288 = vrot.slane %v283, %v287
  %v290 = vmul.f32 %v276, %v288
  %v291 = vmul.f32 %v278, %v288
  %v292 = vmul.f32 %v280, %v288
  %v293 = vmul.f32 %v282, %v288
  %294 = vset.pattern.permute.xlu0 0
  %295 = vperm.xlu0 %294, %v52
  %v296 = vpop.permute.xlu0 %295
  %298 = vset.pattern.permute.xlu0 0
  %299 = vperm.xlu0 %298, %v53
  %v300 = vpop.permute.xlu0 %299
  %302 = vset.pattern.permute.xlu0 0
  %303 = vperm.xlu0 %302, %v54
  %v304 = vpop.permute.xlu0 %303
  %306 = vset.pattern.permute.xlu0 0
  %307 = vperm.xlu0 %306, %v55
  %v308 = vpop.permute.xlu0 %307
  %v310 = vmul.f32 %v296, %v290
  %v311 = vmul.f32 %v300, %v291
  %v312 = vmul.f32 %v304, %v292
  %v313 = vmul.f32 %v308, %v293
  %v314 = vadd.f32 %v271, %v310
  %v315 = vadd.f32 %v272, %v311
  %v316 = vadd.f32 %v273, %v312
  %v317 = vadd.f32 %v274, %v313
  %318 = vrot.lane.b32.xlu0 %v146, 8
  %v319 = vpop.permute.xlu0 %318
  %320 = vrot.lane.b32.xlu0 %v149, 8
  %v321 = vpop.permute.xlu0 %320
  %322 = vrot.lane.b32.xlu0 %v154, 8
  %v323 = vpop.permute.xlu0 %322
  %324 = vrot.lane.b32.xlu0 %v157, 8
  %v325 = vpop.permute.xlu0 %324
  %s326 = scalar_lea.vmem %s7, 1
  %v327 = vld [vmem:[%s326] sm:$0x1]
  %v329 = vlaneseq
  %v330 = vshrl.u32 %v329, 7
  %v331 = vsub.s32 0, %v330
  %v332 = vrot.slane %v327, %v331
  %v334 = vmul.f32 %v319, %v332
  %v335 = vmul.f32 %v321, %v332
  %v336 = vmul.f32 %v323, %v332
  %v337 = vmul.f32 %v325, %v332
  %338 = vset.pattern.permute.xlu0 1
  %339 = vperm.xlu0 %338, %v52
  %v340 = vpop.permute.xlu0 %339
  %342 = vset.pattern.permute.xlu0 1
  %343 = vperm.xlu0 %342, %v53
  %v344 = vpop.permute.xlu0 %343
  %346 = vset.pattern.permute.xlu0 1
  %347 = vperm.xlu0 %346, %v54
  %v348 = vpop.permute.xlu0 %347
  %350 = vset.pattern.permute.xlu0 1
  %351 = vperm.xlu0 %350, %v55
  %v352 = vpop.permute.xlu0 %351
  %v354 = vmul.f32 %v340, %v334
  %v355 = vmul.f32 %v344, %v335
  %v356 = vmul.f32 %v348, %v336
  %v357 = vmul.f32 %v352, %v337
  %v358 = vadd.f32 %v314, %v354
  %v359 = vadd.f32 %v315, %v355
  %v360 = vadd.f32 %v316, %v356
  %v361 = vadd.f32 %v317, %v357
  %362 = vrot.lane.b32.xlu0 %v146, 7
  %v363 = vpop.permute.xlu0 %362
  %364 = vrot.lane.b32.xlu0 %v149, 7
  %v365 = vpop.permute.xlu0 %364
  %366 = vrot.lane.b32.xlu0 %v154, 7
  %v367 = vpop.permute.xlu0 %366
  %368 = vrot.lane.b32.xlu0 %v157, 7
  %v369 = vpop.permute.xlu0 %368
  %s370 = scalar_lea.vmem %s7, 2
  %v371 = vld [vmem:[%s370] sm:$0x1]
  %v373 = vlaneseq
  %v374 = vshrl.u32 %v373, 7
  %v375 = vsub.s32 0, %v374
  %v376 = vrot.slane %v371, %v375
  %v378 = vmul.f32 %v363, %v376
  %v379 = vmul.f32 %v365, %v376
  %v380 = vmul.f32 %v367, %v376
  %v381 = vmul.f32 %v369, %v376
  %382 = vset.pattern.permute.xlu0 2
  %383 = vperm.xlu0 %382, %v52
  %v384 = vpop.permute.xlu0 %383
  %386 = vset.pattern.permute.xlu0 2
  %387 = vperm.xlu0 %386, %v53
  %v388 = vpop.permute.xlu0 %387
  %390 = vset.pattern.permute.xlu0 2
  %391 = vperm.xlu0 %390, %v54
  %v392 = vpop.permute.xlu0 %391
  %394 = vset.pattern.permute.xlu0 2
  %395 = vperm.xlu0 %394, %v55
  %v396 = vpop.permute.xlu0 %395
  %v398 = vmul.f32 %v384, %v378
  %v399 = vmul.f32 %v388, %v379
  %v400 = vmul.f32 %v392, %v380
  %v401 = vmul.f32 %v396, %v381
  %v402 = vadd.f32 %v358, %v398
  %v403 = vadd.f32 %v359, %v399
  %v404 = vadd.f32 %v360, %v400
  %v405 = vadd.f32 %v361, %v401
  %406 = vrot.lane.b32.xlu0 %v146, 1
  %v407 = vpop.permute.xlu0 %406
  %408 = vrot.lane.b32.xlu0 %v149, 1
  %v409 = vpop.permute.xlu0 %408
  %410 = vrot.lane.b32.xlu0 %v154, 1
  %v411 = vpop.permute.xlu0 %410
  %412 = vrot.lane.b32.xlu0 %v157, 1
  %v413 = vpop.permute.xlu0 %412
  %s414 = scalar_lea.vmem %s7, 3
  %v415 = vld [vmem:[%s414] sm:$0x1]
  %v417 = vlaneseq
  %v418 = vshrl.u32 %v417, 7
  %v419 = vsub.s32 0, %v418
  %v420 = vrot.slane %v415, %v419
  %v422 = vmul.f32 %v407, %v420
  %v423 = vmul.f32 %v409, %v420
  %v424 = vmul.f32 %v411, %v420
  %v425 = vmul.f32 %v413, %v420
  %426 = vset.pattern.permute.xlu0 3
  %427 = vperm.xlu0 %426, %v52
  %v428 = vpop.permute.xlu0 %427
  %430 = vset.pattern.permute.xlu0 3
  %431 = vperm.xlu0 %430, %v53
  %v432 = vpop.permute.xlu0 %431
  %434 = vset.pattern.permute.xlu0 3
  %435 = vperm.xlu0 %434, %v54
  %v436 = vpop.permute.xlu0 %435
  %438 = vset.pattern.permute.xlu0 3
  %439 = vperm.xlu0 %438, %v55
  %v440 = vpop.permute.xlu0 %439
  %v442 = vmul.f32 %v428, %v422
  %v443 = vmul.f32 %v432, %v423
  %v444 = vmul.f32 %v436, %v424
  %v445 = vmul.f32 %v440, %v425
  %v446 = vadd.f32 %v402, %v442
  %v447 = vadd.f32 %v403, %v443
  %v448 = vadd.f32 %v404, %v444
  %v449 = vadd.f32 %v405, %v445
  %450 = vrot.lane.b32.xlu0 %v146, 127
  %v451 = vpop.permute.xlu0 %450
  %452 = vrot.lane.b32.xlu0 %v149, 127
  %v453 = vpop.permute.xlu0 %452
  %454 = vrot.lane.b32.xlu0 %v154, 127
  %v455 = vpop.permute.xlu0 %454
  %456 = vrot.lane.b32.xlu0 %v157, 127
  %v457 = vpop.permute.xlu0 %456
  %s458 = scalar_lea.vmem %s7, 5
  %v459 = vld [vmem:[%s458] sm:$0x1]
  %v461 = vlaneseq
  %v462 = vshrl.u32 %v461, 7
  %v463 = vsub.s32 0, %v462
  %v464 = vrot.slane %v459, %v463
  %v466 = vmul.f32 %v451, %v464
  %v467 = vmul.f32 %v453, %v464
  %v468 = vmul.f32 %v455, %v464
  %v469 = vmul.f32 %v457, %v464
  %470 = vset.pattern.permute.xlu0 5
  %471 = vperm.xlu0 %470, %v52
  %v472 = vpop.permute.xlu0 %471
  %474 = vset.pattern.permute.xlu0 5
  %475 = vperm.xlu0 %474, %v53
  %v476 = vpop.permute.xlu0 %475
  %478 = vset.pattern.permute.xlu0 5
  %479 = vperm.xlu0 %478, %v54
  %v480 = vpop.permute.xlu0 %479
  %482 = vset.pattern.permute.xlu0 5
  %483 = vperm.xlu0 %482, %v55
  %v484 = vpop.permute.xlu0 %483
  %v486 = vmul.f32 %v472, %v466
  %v487 = vmul.f32 %v476, %v467
  %v488 = vmul.f32 %v480, %v468
  %v489 = vmul.f32 %v484, %v469
  %v490 = vadd.f32 %v446, %v486
  %v491 = vadd.f32 %v447, %v487
  %v492 = vadd.f32 %v448, %v488
  %v493 = vadd.f32 %v449, %v489
  %494 = vrot.lane.b32.xlu0 %v146, 121
  %v495 = vpop.permute.xlu0 %494
  %496 = vrot.lane.b32.xlu0 %v149, 121
  %v497 = vpop.permute.xlu0 %496
  %498 = vrot.lane.b32.xlu0 %v154, 121
  %v499 = vpop.permute.xlu0 %498
  %500 = vrot.lane.b32.xlu0 %v157, 121
  %v501 = vpop.permute.xlu0 %500
  %s502 = scalar_lea.vmem %s7, 6
  %v503 = vld [vmem:[%s502] sm:$0x1]
  %v505 = vlaneseq
  %v506 = vshrl.u32 %v505, 7
  %v507 = vsub.s32 0, %v506
  %v508 = vrot.slane %v503, %v507
  %v510 = vmul.f32 %v495, %v508
  %v511 = vmul.f32 %v497, %v508
  %v512 = vmul.f32 %v499, %v508
  %v513 = vmul.f32 %v501, %v508
  %514 = vset.pattern.permute.xlu0 6
  %515 = vperm.xlu0 %514, %v52
  %v516 = vpop.permute.xlu0 %515
  %518 = vset.pattern.permute.xlu0 6
  %519 = vperm.xlu0 %518, %v53
  %v520 = vpop.permute.xlu0 %519
  %522 = vset.pattern.permute.xlu0 6
  %523 = vperm.xlu0 %522, %v54
  %v524 = vpop.permute.xlu0 %523
  %526 = vset.pattern.permute.xlu0 6
  %527 = vperm.xlu0 %526, %v55
  %v528 = vpop.permute.xlu0 %527
  %v530 = vmul.f32 %v516, %v510
  %v531 = vmul.f32 %v520, %v511
  %v532 = vmul.f32 %v524, %v512
  %v533 = vmul.f32 %v528, %v513
  %v534 = vadd.f32 %v490, %v530
  %v535 = vadd.f32 %v491, %v531
  %v536 = vadd.f32 %v492, %v532
  %v537 = vadd.f32 %v493, %v533
  %538 = vrot.lane.b32.xlu0 %v146, 120
  %v539 = vpop.permute.xlu0 %538
  %540 = vrot.lane.b32.xlu0 %v149, 120
  %v541 = vpop.permute.xlu0 %540
  %542 = vrot.lane.b32.xlu0 %v154, 120
  %v543 = vpop.permute.xlu0 %542
  %544 = vrot.lane.b32.xlu0 %v157, 120
  %v545 = vpop.permute.xlu0 %544
  %s546 = scalar_lea.vmem %s7, 7
  %v547 = vld [vmem:[%s546] sm:$0x1]
  %v549 = vlaneseq
  %v550 = vshrl.u32 %v549, 7
  %v551 = vsub.s32 0, %v550
  %v552 = vrot.slane %v547, %v551
  %v554 = vmul.f32 %v539, %v552
  %v555 = vmul.f32 %v541, %v552
  %v556 = vmul.f32 %v543, %v552
  %v557 = vmul.f32 %v545, %v552
  %558 = vset.pattern.permute.xlu0 7
  %559 = vperm.xlu0 %558, %v52
  %v560 = vpop.permute.xlu0 %559
  %562 = vset.pattern.permute.xlu0 7
  %563 = vperm.xlu0 %562, %v53
  %v564 = vpop.permute.xlu0 %563
  %566 = vset.pattern.permute.xlu0 7
  %567 = vperm.xlu0 %566, %v54
  %v568 = vpop.permute.xlu0 %567
  %570 = vset.pattern.permute.xlu0 7
  %571 = vperm.xlu0 %570, %v55
  %v572 = vpop.permute.xlu0 %571
  %v574 = vmul.f32 %v560, %v554
  %v575 = vmul.f32 %v564, %v555
  %v576 = vmul.f32 %v568, %v556
  %v577 = vmul.f32 %v572, %v557
  %v578 = vadd.f32 %v534, %v574
  %v579 = vadd.f32 %v535, %v575
  %v580 = vadd.f32 %v536, %v576
  %v581 = vadd.f32 %v537, %v577
  %582 = vrot.lane.b32.xlu0 %v146, 119
  %v583 = vpop.permute.xlu0 %582
  %584 = vrot.lane.b32.xlu0 %v149, 119
  %v585 = vpop.permute.xlu0 %584
  %586 = vrot.lane.b32.xlu0 %v154, 119
  %v587 = vpop.permute.xlu0 %586
  %588 = vrot.lane.b32.xlu0 %v157, 119
  %v589 = vpop.permute.xlu0 %588
  %s590 = scalar_lea.vmem %s7, 8
  %v591 = vld [vmem:[%s590] sm:$0x1]
  %v593 = vlaneseq
  %v594 = vshrl.u32 %v593, 7
  %v595 = vsub.s32 0, %v594
  %v596 = vrot.slane %v591, %v595
  %v598 = vmul.f32 %v583, %v596
  %v599 = vmul.f32 %v585, %v596
  %v600 = vmul.f32 %v587, %v596
  %v601 = vmul.f32 %v589, %v596
  %602 = vset.pattern.permute.xlu0 8
  %603 = vperm.xlu0 %602, %v52
  %v604 = vpop.permute.xlu0 %603
  %606 = vset.pattern.permute.xlu0 8
  %607 = vperm.xlu0 %606, %v53
  %v608 = vpop.permute.xlu0 %607
  %610 = vset.pattern.permute.xlu0 8
  %611 = vperm.xlu0 %610, %v54
  %v612 = vpop.permute.xlu0 %611
  %614 = vset.pattern.permute.xlu0 8
  %615 = vperm.xlu0 %614, %v55
  %v616 = vpop.permute.xlu0 %615
  %v618 = vmul.f32 %v604, %v598
  %v619 = vmul.f32 %v608, %v599
  %v620 = vmul.f32 %v612, %v600
  %v621 = vmul.f32 %v616, %v601
  %v622 = vadd.f32 %v578, %v618
  %v623 = vadd.f32 %v579, %v619
  %v624 = vadd.f32 %v580, %v620
  %v625 = vadd.f32 %v581, %v621
  %627 = vset.pattern.permute.xlu0 4
  %628 = vperm.xlu0 %627, %v56
  %v629 = vpop.permute.xlu0 %628
  %632 = vset.pattern.permute.xlu0 4
  %633 = vperm.xlu0 %632, %v57
  %v634 = vpop.permute.xlu0 %633
  %v636 = vmul.f32 %v629, %v221
  %v637 = vmul.f32 %v634, %v224
  %639 = vset.pattern.permute.xlu0 0
  %640 = vperm.xlu0 %639, %v62
  %v641 = vpop.permute.xlu0 %640
  %644 = vset.pattern.permute.xlu0 0
  %645 = vperm.xlu0 %644, %v63
  %v646 = vpop.permute.xlu0 %645
  %v648 = vadd.f32 %v641, %v636
  %v649 = vadd.f32 %v646, %v637
  %650 = vrot.lane.b32.xlu0 %v221, 9
  %v651 = vpop.permute.xlu0 %650
  %652 = vrot.lane.b32.xlu0 %v224, 9
  %v653 = vpop.permute.xlu0 %652
  %v654 = vmul.f32 %v651, %v288
  %v655 = vmul.f32 %v653, %v288
  %656 = vset.pattern.permute.xlu0 0
  %657 = vperm.xlu0 %656, %v56
  %v658 = vpop.permute.xlu0 %657
  %660 = vset.pattern.permute.xlu0 0
  %661 = vperm.xlu0 %660, %v57
  %v662 = vpop.permute.xlu0 %661
  %v664 = vmul.f32 %v658, %v654
  %v665 = vmul.f32 %v662, %v655
  %v666 = vadd.f32 %v648, %v664
  %v667 = vadd.f32 %v649, %v665
  %668 = vrot.lane.b32.xlu0 %v221, 8
  %v669 = vpop.permute.xlu0 %668
  %670 = vrot.lane.b32.xlu0 %v224, 8
  %v671 = vpop.permute.xlu0 %670
  %v672 = vmul.f32 %v669, %v332
  %v673 = vmul.f32 %v671, %v332
  %674 = vset.pattern.permute.xlu0 1
  %675 = vperm.xlu0 %674, %v56
  %v676 = vpop.permute.xlu0 %675
  %678 = vset.pattern.permute.xlu0 1
  %679 = vperm.xlu0 %678, %v57
  %v680 = vpop.permute.xlu0 %679
  %v682 = vmul.f32 %v676, %v672
  %v683 = vmul.f32 %v680, %v673
  %v684 = vadd.f32 %v666, %v682
  %v685 = vadd.f32 %v667, %v683
  %686 = vrot.lane.b32.xlu0 %v221, 7
  %v687 = vpop.permute.xlu0 %686
  %688 = vrot.lane.b32.xlu0 %v224, 7
  %v689 = vpop.permute.xlu0 %688
  %v690 = vmul.f32 %v687, %v376
  %v691 = vmul.f32 %v689, %v376
  %692 = vset.pattern.permute.xlu0 2
  %693 = vperm.xlu0 %692, %v56
  %v694 = vpop.permute.xlu0 %693
  %696 = vset.pattern.permute.xlu0 2
  %697 = vperm.xlu0 %696, %v57
  %v698 = vpop.permute.xlu0 %697
  %v700 = vmul.f32 %v694, %v690
  %v701 = vmul.f32 %v698, %v691
  %v702 = vadd.f32 %v684, %v700
  %v703 = vadd.f32 %v685, %v701
  %704 = vrot.lane.b32.xlu0 %v221, 1
  %v705 = vpop.permute.xlu0 %704
  %706 = vrot.lane.b32.xlu0 %v224, 1
  %v707 = vpop.permute.xlu0 %706
  %v708 = vmul.f32 %v705, %v420
  %v709 = vmul.f32 %v707, %v420
  %710 = vset.pattern.permute.xlu0 3
  %711 = vperm.xlu0 %710, %v56
  %v712 = vpop.permute.xlu0 %711
  %714 = vset.pattern.permute.xlu0 3
  %715 = vperm.xlu0 %714, %v57
  %v716 = vpop.permute.xlu0 %715
  %v718 = vmul.f32 %v712, %v708
  %v719 = vmul.f32 %v716, %v709
  %v720 = vadd.f32 %v702, %v718
  %v721 = vadd.f32 %v703, %v719
  %722 = vrot.lane.b32.xlu0 %v221, 127
  %v723 = vpop.permute.xlu0 %722
  %724 = vrot.lane.b32.xlu0 %v224, 127
  %v725 = vpop.permute.xlu0 %724
  %v726 = vmul.f32 %v723, %v464
  %v727 = vmul.f32 %v725, %v464
  %728 = vset.pattern.permute.xlu0 5
  %729 = vperm.xlu0 %728, %v56
  %v730 = vpop.permute.xlu0 %729
  %732 = vset.pattern.permute.xlu0 5
  %733 = vperm.xlu0 %732, %v57
  %v734 = vpop.permute.xlu0 %733
  %v736 = vmul.f32 %v730, %v726
  %v737 = vmul.f32 %v734, %v727
  %v738 = vadd.f32 %v720, %v736
  %v739 = vadd.f32 %v721, %v737
  %740 = vrot.lane.b32.xlu0 %v221, 121
  %v741 = vpop.permute.xlu0 %740
  %742 = vrot.lane.b32.xlu0 %v224, 121
  %v743 = vpop.permute.xlu0 %742
  %v744 = vmul.f32 %v741, %v508
  %v745 = vmul.f32 %v743, %v508
  %746 = vset.pattern.permute.xlu0 6
  %747 = vperm.xlu0 %746, %v56
  %v748 = vpop.permute.xlu0 %747
  %750 = vset.pattern.permute.xlu0 6
  %751 = vperm.xlu0 %750, %v57
  %v752 = vpop.permute.xlu0 %751
  %v754 = vmul.f32 %v748, %v744
  %v755 = vmul.f32 %v752, %v745
  %v756 = vadd.f32 %v738, %v754
  %v757 = vadd.f32 %v739, %v755
  %758 = vrot.lane.b32.xlu0 %v221, 120
  %v759 = vpop.permute.xlu0 %758
  %760 = vrot.lane.b32.xlu0 %v224, 120
  %v761 = vpop.permute.xlu0 %760
  %v762 = vmul.f32 %v759, %v552
  %v763 = vmul.f32 %v761, %v552
  %764 = vset.pattern.permute.xlu0 7
  %765 = vperm.xlu0 %764, %v56
  %v766 = vpop.permute.xlu0 %765
  %768 = vset.pattern.permute.xlu0 7
  %769 = vperm.xlu0 %768, %v57
  %v770 = vpop.permute.xlu0 %769
  %v772 = vmul.f32 %v766, %v762
  %v773 = vmul.f32 %v770, %v763
  %v774 = vadd.f32 %v756, %v772
  %v775 = vadd.f32 %v757, %v773
  %776 = vrot.lane.b32.xlu0 %v221, 119
  %v777 = vpop.permute.xlu0 %776
  %778 = vrot.lane.b32.xlu0 %v224, 119
  %v779 = vpop.permute.xlu0 %778
  %v780 = vmul.f32 %v777, %v596
  %v781 = vmul.f32 %v779, %v596
  %782 = vset.pattern.permute.xlu0 8
  %783 = vperm.xlu0 %782, %v56
  %v784 = vpop.permute.xlu0 %783
  %786 = vset.pattern.permute.xlu0 8
  %787 = vperm.xlu0 %786, %v57
  %v788 = vpop.permute.xlu0 %787
  %v790 = vmul.f32 %v784, %v780
  %v791 = vmul.f32 %v788, %v781
  %v792 = vadd.f32 %v774, %v790
  %v793 = vadd.f32 %v775, %v791
  %v794 = vld [vmem:[%s8] sm:$0xff]
  %v795 = vld [vmem:[%s8 + $0x8] sm:$0xff]
  %v796 = vld [vmem:[%s9] sm:$0xff]
  %v797 = vld [vmem:[%s9 + $0x8] sm:$0xff]
  %v798 = vmul.f32 %v622, %v622
  %v799 = vmul.f32 %v623, %v623
  %vm800 = vcmask 523264
  %v801 = vsel %vm800, %v798, 0.0
  %802 = vadd.xlane.f32.xlu0 %v801
  %v803 = vpop.xlane.xlu0 %802
  %v804 = vsel %vm800, %v799, 0.0
  %805 = vadd.xlane.f32.xlu0 %v804
  %v806 = vpop.xlane.xlu0 %805
  %v807 = vmax.f32 %v803, 1e-24
  %v808 = vmax.f32 %v806, 1e-24
  %v809 = vrsqrt.pop %v807
  %v810 = vrsqrt.pop %v808
  %v811 = vmul.f32 %v622, %v809
  %v812 = vmul.f32 %v623, %v810
  %v813 = vmul.f32 %v792, %v792
  %v814 = vmul.f32 %v793, %v793
  %v815 = vsel %vm800, %v813, 0.0
  %816 = vadd.xlane.f32.xlu0 %v815
  %v817 = vpop.xlane.xlu0 %816
  %v818 = vsel %vm800, %v814, 0.0
  %819 = vadd.xlane.f32.xlu0 %v818
  %v820 = vpop.xlane.xlu0 %819
  %v821 = vmax.f32 %v817, 1e-24
  %v822 = vmax.f32 %v820, 1e-24
  %v823 = vrsqrt.pop %v821
  %v824 = vrsqrt.pop %v822
  %v825 = vmul.f32 %v792, %v823
  %v826 = vmul.f32 %v793, %v824
  %828 = vset.pattern.permute.xlu0 0
  %829 = vperm.xlu0 %828, %v794
  %v830 = vpop.permute.xlu0 %829
  %833 = vset.pattern.permute.xlu0 0
  %834 = vperm.xlu0 %833, %v795
  %v835 = vpop.permute.xlu0 %834
  %v837 = vmul.f32 %v825, %v830
  %v838 = vmul.f32 %v826, %v835
  %v839 = vpack.c.bf16 %v838, %v837
  %v840 = vpack.c.bf16 %v812, %v811
  %v842 = vsel %vm800, %v839, 0
  %v845 = vsel %vm800, %v840, 0
  %847 = vmatprep.subr.bf16.mxu0 0
  %848 = vmatpush1.bf16.xpose.msra.mxu0 %v845
  %849 = vmatprep.subr.bf16.mxu0 0
  %850 = vmatpush1.bf16.xpose.msra.mxu0 0
  %851 = vmatprep.subr.bf16.mxu0 0
  %852 = vmatpush1.bf16.xpose.msra.mxu0 0
  %853 = vmatprep.subr.bf16.mxu0 0
  %854 = vmatpush1.bf16.xpose.msra.mxu0 0
  %855 = vmatprep.subr.bf16.mxu0 0
  %856 = vmatpush1.bf16.xpose.msra.mxu0 0
  %857 = vmatprep.subr.bf16.mxu0 0
  %858 = vmatpush1.bf16.xpose.msra.mxu0 0
  %859 = vmatprep.subr.bf16.mxu0 0
  %860 = vmatpush1.bf16.xpose.msra.mxu0 0
  %861 = vmatprep.subr.bf16.mxu0 0
  %862 = vmatpush1.bf16.xpose.msra.mxu0 0
  %863 = vmatprep.subr.bf16.mxu0 0
  %864 = vmatpush1.bf16.xpose.msra.mxu0 0
  %865 = vmatprep.subr.bf16.mxu0 0
  %866 = vmatpush1.bf16.xpose.msra.mxu0 0
  %867 = vmatprep.subr.bf16.mxu0 0
  %868 = vmatpush1.bf16.xpose.msra.mxu0 0
  %869 = vmatprep.subr.bf16.mxu0 0
  %870 = vmatpush1.bf16.xpose.msra.mxu0 0
  %871 = vmatprep.subr.bf16.mxu0 0
  %872 = vmatpush1.bf16.xpose.msra.mxu0 0
  %873 = vmatprep.subr.bf16.mxu0 0
  %874 = vmatpush1.bf16.xpose.msra.mxu0 0
  %875 = vmatprep.subr.bf16.mxu0 0
  %876 = vmatpush1.bf16.xpose.msra.mxu0 0
  %877 = vmatprep.subr.bf16.mxu0 0
  %878 = vmatpush1.bf16.xpose.msra.mxu0 0
  %879 = vmatprep.mubr.bf16.mxu0 0
  %880 = vmatmul.mubr.bf16.gmra.mrb[0].mxu0 %v842
  %v881 = vpop.f32.mrb[0].mxu0
  %v882 = vadd.f32 %v796, %v881
  %v883 = vpop.f32.mrb[0].mxu0
  %v884 = vpop.f32.mrb[0].mxu0
  %v885 = vadd.f32 %v797, %v884
  %v886 = vpop.f32.mrb[0].mxu0
  %887 = vdwg.mxu0
  %v888 = vsel %vm104, %v882, -inf
  %889 = vmax.xlane.f32.xlu0 %v888
  %v890 = vpop.xlane.xlu0 %889
  %v891 = vsel %vm104, %v885, -inf
  %892 = vmax.xlane.f32.xlu0 %v891
  %v893 = vpop.xlane.xlu0 %892
  %v894 = vsub.f32 %v882, %v890
  %v895 = vsub.f32 %v885, %v893
  %v896 = vmul.f32 %v894, 1.442695
  %v897 = vpow.pop %v896
  %v898 = vmul.f32 %v895, 1.442695
  %v899 = vpow.pop %v898
  %v900 = vsel %vm104, %v897, 0.0
  %901 = vadd.xlane.f32.xlu0 %v900
  %v902 = vpop.xlane.xlu0 %901
  %v903 = vsel %vm104, %v899, 0.0
  %904 = vadd.xlane.f32.xlu0 %v903
  %v905 = vpop.xlane.xlu0 %904
  %v906 = vrcp.pop %v902
  %v907 = vrcp.pop %v905
  %v908 = vmul.f32 %v897, %v906
  %v909 = vmul.f32 %v899, %v907
  %v910 = vpack.c.bf16 %v909, %v908
  %v911 = vpack.c.bf16 %v625, %v624
  %v913 = vsel %vm104, %v910, 0
  %915 = vmatprep.subr.bf16.mxu0 0
  %916 = vmatpush1.bf16.msra.mxu0 %v911
  %917 = vmatprep.subr.bf16.mxu0 0
  %918 = vmatpush1.bf16.msra.mxu0 0
  %919 = vmatprep.subr.bf16.mxu0 0
  %920 = vmatpush1.bf16.msra.mxu0 0
  %921 = vmatprep.subr.bf16.mxu0 0
  %922 = vmatpush1.bf16.msra.mxu0 0
  %923 = vmatprep.subr.bf16.mxu0 0
  %924 = vmatpush1.bf16.msra.mxu0 0
  %925 = vmatprep.subr.bf16.mxu0 0
  %926 = vmatpush1.bf16.msra.mxu0 0
  %927 = vmatprep.subr.bf16.mxu0 0
  %928 = vmatpush1.bf16.msra.mxu0 0
  %929 = vmatprep.subr.bf16.mxu0 0
  %930 = vmatpush1.bf16.msra.mxu0 0
  %931 = vmatprep.subr.bf16.mxu0 0
  %932 = vmatpush1.bf16.msra.mxu0 0
  %933 = vmatprep.subr.bf16.mxu0 0
  %934 = vmatpush1.bf16.msra.mxu0 0
  %935 = vmatprep.subr.bf16.mxu0 0
  %936 = vmatpush1.bf16.msra.mxu0 0
  %937 = vmatprep.subr.bf16.mxu0 0
  %938 = vmatpush1.bf16.msra.mxu0 0
  %939 = vmatprep.subr.bf16.mxu0 0
  %940 = vmatpush1.bf16.msra.mxu0 0
  %941 = vmatprep.subr.bf16.mxu0 0
  %942 = vmatpush1.bf16.msra.mxu0 0
  %943 = vmatprep.subr.bf16.mxu0 0
  %944 = vmatpush1.bf16.msra.mxu0 0
  %945 = vmatprep.subr.bf16.mxu0 0
  %946 = vmatpush1.bf16.msra.mxu0 0
  %947 = vmatprep.mubr.bf16.mxu0 0
  %948 = vmatmul.mubr.bf16.gmra.mrb[0].mxu0 %v913
  %v949 = vpop.f32.mrb[0].mxu0
  %v950 = vadd.f32 0.0, %v949
  %v951 = vpop.f32.mrb[0].mxu0
  %v952 = vpop.f32.mrb[0].mxu0
  %v953 = vadd.f32 0.0, %v952
  %v954 = vpop.f32.mrb[0].mxu0
  %955 = vdwg.mxu0
  %958 = vrot.lane.b32.xlu0 %v798, 64
  %v959 = vpop.permute.xlu0 %958
  %960 = vrot.lane.b32.xlu0 %v799, 64
  %v961 = vpop.permute.xlu0 %960
  %v964 = vsel %vm800, %v959, 0.0
  %965 = vadd.xlane.f32.xlu0 %v964
  %v966 = vpop.xlane.xlu0 %965
  %v967 = vsel %vm800, %v961, 0.0
  %968 = vadd.xlane.f32.xlu0 %v967
  %v969 = vpop.xlane.xlu0 %968
  %v970 = vmax.f32 %v966, 1e-24
  %v971 = vmax.f32 %v969, 1e-24
  %v972 = vrsqrt.pop %v970
  %v973 = vrsqrt.pop %v971
  %v974 = vmul.f32 %v622, %v972
  %v975 = vmul.f32 %v623, %v973
  %978 = vrot.lane.b32.xlu0 %v813, 64
  %v979 = vpop.permute.xlu0 %978
  %980 = vrot.lane.b32.xlu0 %v814, 64
  %v981 = vpop.permute.xlu0 %980
  %v984 = vsel %vm800, %v979, 0.0
  %985 = vadd.xlane.f32.xlu0 %v984
  %v986 = vpop.xlane.xlu0 %985
  %v987 = vsel %vm800, %v981, 0.0
  %988 = vadd.xlane.f32.xlu0 %v987
  %v989 = vpop.xlane.xlu0 %988
  %v990 = vmax.f32 %v986, 1e-24
  %v991 = vmax.f32 %v989, 1e-24
  %v992 = vrsqrt.pop %v990
  %v993 = vrsqrt.pop %v991
  %v994 = vmul.f32 %v792, %v992
  %v995 = vmul.f32 %v793, %v993
  %v996 = vmul.f32 %v994, %v830
  %v997 = vmul.f32 %v995, %v835
  %v998 = vpack.c.bf16 %v997, %v996
  %v999 = vpack.c.bf16 %v975, %v974
  %1001 = vrot.lane.b32.xlu0 %v998, 64
  %v1002 = vpop.permute.xlu0 %1001
  %1004 = vrot.lane.b32.xlu0 %v999, 64
  %v1005 = vpop.permute.xlu0 %1004
  %v1007 = vsel %vm800, %v1002, 0
  %v1010 = vsel %vm800, %v1005, 0
  %1012 = vmatprep.subr.bf16.mxu0 0
  %1013 = vmatpush1.bf16.xpose.msra.mxu0 %v1010
  %1014 = vmatprep.subr.bf16.mxu0 0
  %1015 = vmatpush1.bf16.xpose.msra.mxu0 0
  %1016 = vmatprep.subr.bf16.mxu0 0
  %1017 = vmatpush1.bf16.xpose.msra.mxu0 0
  %1018 = vmatprep.subr.bf16.mxu0 0
  %1019 = vmatpush1.bf16.xpose.msra.mxu0 0
  %1020 = vmatprep.subr.bf16.mxu0 0
  %1021 = vmatpush1.bf16.xpose.msra.mxu0 0
  %1022 = vmatprep.subr.bf16.mxu0 0
  %1023 = vmatpush1.bf16.xpose.msra.mxu0 0
  %1024 = vmatprep.subr.bf16.mxu0 0
  %1025 = vmatpush1.bf16.xpose.msra.mxu0 0
  %1026 = vmatprep.subr.bf16.mxu0 0
  %1027 = vmatpush1.bf16.xpose.msra.mxu0 0
  %1028 = vmatprep.subr.bf16.mxu0 0
  %1029 = vmatpush1.bf16.xpose.msra.mxu0 0
  %1030 = vmatprep.subr.bf16.mxu0 0
  %1031 = vmatpush1.bf16.xpose.msra.mxu0 0
  %1032 = vmatprep.subr.bf16.mxu0 0
  %1033 = vmatpush1.bf16.xpose.msra.mxu0 0
  %1034 = vmatprep.subr.bf16.mxu0 0
  %1035 = vmatpush1.bf16.xpose.msra.mxu0 0
  %1036 = vmatprep.subr.bf16.mxu0 0
  %1037 = vmatpush1.bf16.xpose.msra.mxu0 0
  %1038 = vmatprep.subr.bf16.mxu0 0
  %1039 = vmatpush1.bf16.xpose.msra.mxu0 0
  %1040 = vmatprep.subr.bf16.mxu0 0
  %1041 = vmatpush1.bf16.xpose.msra.mxu0 0
  %1042 = vmatprep.subr.bf16.mxu0 0
  %1043 = vmatpush1.bf16.xpose.msra.mxu0 0
  %1044 = vmatprep.mubr.bf16.mxu0 0
  %1045 = vmatmul.mubr.bf16.gmra.mrb[0].mxu0 %v1007
  %v1046 = vpop.f32.mrb[0].mxu0
  %v1047 = vadd.f32 %v796, %v1046
  %v1048 = vpop.f32.mrb[0].mxu0
  %v1049 = vpop.f32.mrb[0].mxu0
  %v1050 = vadd.f32 %v797, %v1049
  %v1051 = vpop.f32.mrb[0].mxu0
  %1052 = vdwg.mxu0
  %v1053 = vsel %vm104, %v1047, -inf
  %1054 = vmax.xlane.f32.xlu0 %v1053
  %v1055 = vpop.xlane.xlu0 %1054
  %v1056 = vsel %vm104, %v1050, -inf
  %1057 = vmax.xlane.f32.xlu0 %v1056
  %v1058 = vpop.xlane.xlu0 %1057
  %v1059 = vsub.f32 %v1047, %v1055
  %v1060 = vsub.f32 %v1050, %v1058
  %v1061 = vmul.f32 %v1059, 1.442695
  %v1062 = vpow.pop %v1061
  %v1063 = vmul.f32 %v1060, 1.442695
  %v1064 = vpow.pop %v1063
  %v1065 = vsel %vm104, %v1062, 0.0
  %1066 = vadd.xlane.f32.xlu0 %v1065
  %v1067 = vpop.xlane.xlu0 %1066
  %v1068 = vsel %vm104, %v1064, 0.0
  %1069 = vadd.xlane.f32.xlu0 %v1068
  %v1070 = vpop.xlane.xlu0 %1069
  %v1071 = vrcp.pop %v1067
  %v1072 = vrcp.pop %v1070
  %v1073 = vmul.f32 %v1062, %v1071
  %v1074 = vmul.f32 %v1064, %v1072
  %v1075 = vpack.c.bf16 %v1074, %v1073
  %1077 = vrot.lane.b32.xlu0 %v911, 64
  %v1078 = vpop.permute.xlu0 %1077
  %v1081 = vsel %vm104, %v1075, 0
  %1083 = vmatprep.subr.bf16.mxu0 0
  %1084 = vmatpush1.bf16.msra.mxu0 %v1078
  %1085 = vmatprep.subr.bf16.mxu0 0
  %1086 = vmatpush1.bf16.msra.mxu0 0
  %1087 = vmatprep.subr.bf16.mxu0 0
  %1088 = vmatpush1.bf16.msra.mxu0 0
  %1089 = vmatprep.subr.bf16.mxu0 0
  %1090 = vmatpush1.bf16.msra.mxu0 0
  %1091 = vmatprep.subr.bf16.mxu0 0
  %1092 = vmatpush1.bf16.msra.mxu0 0
  %1093 = vmatprep.subr.bf16.mxu0 0
  %1094 = vmatpush1.bf16.msra.mxu0 0
  %1095 = vmatprep.subr.bf16.mxu0 0
  %1096 = vmatpush1.bf16.msra.mxu0 0
  %1097 = vmatprep.subr.bf16.mxu0 0
  %1098 = vmatpush1.bf16.msra.mxu0 0
  %1099 = vmatprep.subr.bf16.mxu0 0
  %1100 = vmatpush1.bf16.msra.mxu0 0
  %1101 = vmatprep.subr.bf16.mxu0 0
  %1102 = vmatpush1.bf16.msra.mxu0 0
  %1103 = vmatprep.subr.bf16.mxu0 0
  %1104 = vmatpush1.bf16.msra.mxu0 0
  %1105 = vmatprep.subr.bf16.mxu0 0
  %1106 = vmatpush1.bf16.msra.mxu0 0
  %1107 = vmatprep.subr.bf16.mxu0 0
  %1108 = vmatpush1.bf16.msra.mxu0 0
  %1109 = vmatprep.subr.bf16.mxu0 0
  %1110 = vmatpush1.bf16.msra.mxu0 0
  %1111 = vmatprep.subr.bf16.mxu0 0
  %1112 = vmatpush1.bf16.msra.mxu0 0
  %1113 = vmatprep.subr.bf16.mxu0 0
  %1114 = vmatpush1.bf16.msra.mxu0 0
  %1115 = vmatprep.mubr.bf16.mxu0 0
  %1116 = vmatmul.mubr.bf16.gmra.mrb[0].mxu0 %v1081
  %v1117 = vpop.f32.mrb[0].mxu0
  %v1118 = vadd.f32 0.0, %v1117
  %v1119 = vpop.f32.mrb[0].mxu0
  %v1120 = vpop.f32.mrb[0].mxu0
  %v1121 = vadd.f32 0.0, %v1120
  %v1122 = vpop.f32.mrb[0].mxu0
  %1123 = vdwg.mxu0
  %1126 = vrot.lane.b32.xlu0 %v1118, 64
  %v1127 = vpop.permute.xlu0 %1126
  %1128 = vrot.lane.b32.xlu0 %v1121, 64
  %v1129 = vpop.permute.xlu0 %1128
  %v1132 = vsel %vm800, %v950, %v1127
  %v1133 = vsel %vm800, %v953, %v1129
  %v1134 = vld [vmem:[%s10] sm:$0xf]
  %v1135 = vld [vmem:[%s10 + $0x4] sm:$0xf]
  %v1136 = vpack.c.bf16 %v1133, %v1132
  %v1137 = vld [vmem:[%s11] sm:$0xff]
  %v1138 = vld [vmem:[%s11 + $0x8] sm:$0xff]
  %1140 = vset.pattern.permute.xlu0 0
  %1141 = vperm.xlu0 %1140, %v1137
  %v1142 = vpop.permute.xlu0 %1141
  %1145 = vset.pattern.permute.xlu0 0
  %1146 = vperm.xlu0 %1145, %v1138
  %v1147 = vpop.permute.xlu0 %1146
  %v1151 = vunpack.c.l.b16 %v1134
  %v1152 = vunpack.c.l.b16 %v1135
  %v1153 = vpack.c.b16 %v1152, %v1151
  %v1155 = vsel %vm104, %v1153, 0
  %1157 = vmatprep.subr.bf16.mxu0 0
  %1158 = vmatpush1.bf16.msra.mxu0 %v1136
  %1159 = vmatprep.subr.bf16.mxu0 0
  %1160 = vmatpush1.bf16.msra.mxu0 0
  %1161 = vmatprep.subr.bf16.mxu0 0
  %1162 = vmatpush1.bf16.msra.mxu0 0
  %1163 = vmatprep.subr.bf16.mxu0 0
  %1164 = vmatpush1.bf16.msra.mxu0 0
  %1165 = vmatprep.subr.bf16.mxu0 0
  %1166 = vmatpush1.bf16.msra.mxu0 0
  %1167 = vmatprep.subr.bf16.mxu0 0
  %1168 = vmatpush1.bf16.msra.mxu0 0
  %1169 = vmatprep.subr.bf16.mxu0 0
  %1170 = vmatpush1.bf16.msra.mxu0 0
  %1171 = vmatprep.subr.bf16.mxu0 0
  %1172 = vmatpush1.bf16.msra.mxu0 0
  %1173 = vmatprep.subr.bf16.mxu0 0
  %1174 = vmatpush1.bf16.msra.mxu0 0
  %1175 = vmatprep.subr.bf16.mxu0 0
  %1176 = vmatpush1.bf16.msra.mxu0 0
  %1177 = vmatprep.subr.bf16.mxu0 0
  %1178 = vmatpush1.bf16.msra.mxu0 0
  %1179 = vmatprep.subr.bf16.mxu0 0
  %1180 = vmatpush1.bf16.msra.mxu0 0
  %1181 = vmatprep.subr.bf16.mxu0 0
  %1182 = vmatpush1.bf16.msra.mxu0 0
  %1183 = vmatprep.subr.bf16.mxu0 0
  %1184 = vmatpush1.bf16.msra.mxu0 0
  %1185 = vmatprep.subr.bf16.mxu0 0
  %1186 = vmatpush1.bf16.msra.mxu0 0
  %1187 = vmatprep.subr.bf16.mxu0 0
  %1188 = vmatpush1.bf16.msra.mxu0 0
  %1189 = vmatprep.mubr.bf16.mxu0 0
  %1190 = vmatmul.mubr.bf16.gmra.mrb[0].mxu0 %v1155
  %v1191 = vpop.f32.mrb[0].mxu0
  %v1192 = vadd.f32 %v1142, %v1191
  %v1193 = vpop.f32.mrb[0].mxu0
  %v1194 = vpop.f32.mrb[0].mxu0
  %v1195 = vadd.f32 %v1147, %v1194
  %v1196 = vpop.f32.mrb[0].mxu0
  %1197 = vdwg.mxu0
  %1198 = vst [vmem:[%s12] sm:$0xff] %v1192
  %1199 = vst [vmem:[%s12 + $0x8] sm:$0xff] %v1195
  // Predicated region
  $region50: #{attention1_forward.1} parent=0 // pred_check
    _
  $region51: #{attention1_forward.1} parent=0 // pred_check_branch
    %1201 = sbr.rel (0) target = $region53
  $region52: #{attention1_forward.1} parent=0 // pred_region
    _
  $region53: #{attention1_forward.1} parent=0 // pred_fallthru
    _
  // Predicated region
  $region54: #{attention1_forward.1} parent=0 // pred_check
    _
  $region55: #{attention1_forward.1} parent=0 // pred_check_branch
    %1203 = sbr.rel (0) target = $region57
  $region56: #{attention1_forward.1} parent=0 // pred_region
    _
  $region57: #{attention1_forward.1} parent=0 // pred_fallthru
    _

</llo_original>
